<compile_context>
chip_gen: v7x
topology: tpu7x:2x2x1
jax: 0.10.0
libtpu: 0.0.40
codegen_flags: <defaults>
</compile_context>

<pallas_src>
import functools

import jax
import jax.numpy as jnp
import numpy as np
from jax.experimental import pallas as pl
from jax.experimental.pallas import tpu as pltpu


# ----------------------------------------------------------------------------
# SE3Convolution as a Pallas matmul kernel.
#   patches: (Dp, B*Ho*Wo, K*K*Cin)  -- (dy, dx, cin) folded into the lane dim
#   w2:      (K, K*K*Cin, Cp)        -- Cp = Cout padded to a multiple of 128
# grid = (Do, K): axis 0 = output depth plane ("parallel"), axis 1 = dz
# ("arbitrary" reduction).  The input block for (zo, dz) is the single padded
# depth plane zo*stride + dz, selected in the index_map (no in-kernel copies).
# Outputs: y  (Do, B*Ho*Wo, Cp) f32 conv result (lane-dense),
#          ss (Do, 1, Cp) per-plane per-channel sum of squares (fused BN stats)
# ----------------------------------------------------------------------------
def _conv_kernel(p_ref, w_ref, y_ref, ss_ref, acc_ref, *, K):
    dz = pl.program_id(1)

    @pl.when(dz == 0)
    def _init():
        acc_ref[...] = jnp.zeros_like(acc_ref)

    # (BHW, KKC) @ (KKC, Cp) -> f32 accumulation on the MXU.
    acc_ref[...] += jnp.dot(p_ref[0], w_ref[dz],
                            preferred_element_type=jnp.float32)

    @pl.when(dz == K - 1)
    def _finalize():
        acc = acc_ref[...]
        y_ref[0] = acc.astype(y_ref.dtype)
        ss_ref[0] = jnp.sum(acc * acc, axis=0, keepdims=True)   # (1, Cp)


def se3_conv(patches, w2, *, Do, stride, K):
    Dp, BHW, KKC = patches.shape
    Cp = w2.shape[-1]
    kernel = functools.partial(_conv_kernel, K=K)
    return pl.pallas_call(
        kernel,
        out_shape=(
            jax.ShapeDtypeStruct((Do, BHW, Cp), jnp.float32),
            jax.ShapeDtypeStruct((Do, 1, Cp), jnp.float32),
        ),
        grid_spec=pltpu.PrefetchScalarGridSpec(
            num_scalar_prefetch=0,
            grid=(Do, K),
            in_specs=[
                # one padded depth plane per step; block size 1 along Dp ->
                # the returned block index is an element offset (zo*s + dz).
                pl.BlockSpec((1, BHW, KKC),
                             lambda zo, dz: (zo * stride + dz, 0, 0)),
                # full weight tensor resident in VMEM (constant index map).
                pl.BlockSpec((K, KKC, Cp), lambda zo, dz: (0, 0, 0)),
            ],
            out_specs=(
                pl.BlockSpec((1, BHW, Cp), lambda zo, dz: (zo, 0, 0)),
                pl.BlockSpec((1, 1, Cp), lambda zo, dz: (zo, 0, 0)),
            ),
            scratch_shapes=[pltpu.VMEM((BHW, Cp), jnp.float32)],
        ),
        compiler_params=pltpu.CompilerParams(
            dimension_semantics=("parallel", "arbitrary"),
            vmem_limit_bytes=32 * 1024 * 1024,
        ),
    )(patches, w2)


# ----------------------------------------------------------------------------
# SE3BatchNorm + BiasRelu apply kernel (vectorized, lane-parallel).
# The per-field scale is precomputed from the fused conv statistics; here we
# only stream y once:  out = where(mask, relu(y*scale + bias), y*scale)
#   y: (Do, BHW, Cp);  scale/bias/mask: (1, Cp) lane rows (resident).
# ----------------------------------------------------------------------------
def _bn_apply_kernel(y_ref, scale_ref, bias_ref, mask_ref, o_ref):
    y = y_ref[...]                                   # (1, BHW, Cp)
    scaled = y * scale_ref[...]                      # broadcast over sublanes
    biased = scaled + bias_ref[...]
    o_ref[...] = jnp.where(mask_ref[...] > 0.0,
                           jnp.maximum(biased, 0.0), scaled)


def bn_bias_relu_apply(y, scale_row, bias_row, mask_row):
    Do, BHW, Cp = y.shape
    return pl.pallas_call(
        _bn_apply_kernel,
        out_shape=jax.ShapeDtypeStruct((Do, BHW, Cp), jnp.float32),
        grid_spec=pltpu.PrefetchScalarGridSpec(
            num_scalar_prefetch=0,
            grid=(Do,),
            in_specs=[
                pl.BlockSpec((1, BHW, Cp), lambda zo: (zo, 0, 0)),
                pl.BlockSpec((1, Cp), lambda zo: (0, 0)),
                pl.BlockSpec((1, Cp), lambda zo: (0, 0)),
                pl.BlockSpec((1, Cp), lambda zo: (0, 0)),
            ],
            out_specs=pl.BlockSpec((1, BHW, Cp), lambda zo: (zo, 0, 0)),
        ),
        compiler_params=pltpu.CompilerParams(
            dimension_semantics=("parallel",)),
    )(y, scale_row, bias_row, mask_row)


# ----------------------------------------------------------------------------
# Block forward (NCDHW interface, like the PyTorch module)
# ----------------------------------------------------------------------------
def block_forward(x, params, repr_in, repr_out, relu=True, stride=1,
                  compute_dtype=jnp.float32, eps=1e-5):
    n1i, n3i, n5i = repr_in
    n1o, n3o, n5o = repr_out
    B, C, D, H, W = x.shape
    assert C == n1i + 3 * n3i + 5 * n5i
    K, pad = 7, 3

    # ---- TensorProduct of l=1 fields with themselves (plain JAX, fused) ----
    if n3i > 0:
        x3 = x[:, n1i:n1i + 3 * n3i].reshape(B, n3i, 3, D, H, W)
        t = (x3[:, :, :, None] * x3[:, :, None, :]).reshape(B, n3i * 9, D, H, W)
        xt = jnp.concatenate([x, t], axis=1)
    else:
        xt = x
    Cin = xt.shape[1]
    Cout = n1o + 3 * n3o + 5 * n5o
    Cp = int(np.ceil(Cout / 128.0)) * 128             # lane-dense output width

    # ---- channels-last + spatial zero padding ------------------------------
    xcl = jnp.transpose(xt, (0, 2, 3, 4, 1))          # (B, D, H, W, Cin)
    xpad = jnp.pad(xcl, ((0, 0), (pad, pad), (pad, pad), (pad, pad), (0, 0)))
    Do = (D + 2 * pad - K) // stride + 1
    Ho = (H + 2 * pad - K) // stride + 1
    Wo = (W + 2 * pad - K) // stride + 1
    Dp = D + 2 * pad

    # ---- im2col over (dy, dx); conv stride folded into the gather ----------
    yi = (jnp.arange(Ho) * stride)[:, None] + jnp.arange(K)[None, :]   # (Ho,K)
    xi = (jnp.arange(Wo) * stride)[:, None] + jnp.arange(K)[None, :]   # (Wo,K)
    P = xpad[:, :, yi]                         # (B, Dp, Ho, K, Wp, Cin)
    P = P[:, :, :, :, xi]                      # (B, Dp, Ho, K, Wo, K, Cin)
    P = jnp.transpose(P, (1, 0, 2, 4, 3, 5, 6))  # (Dp, B, Ho, Wo, Kdy, Kdx, Cin)
    BHW = B * Ho * Wo
    KKC = K * K * Cin
    P = P.reshape(Dp, BHW, KKC).astype(compute_dtype)

    # weights: (K,K,K,Cin,Cout) -> (K, K*K*Cin, Cp) with zero-padded channels
    w2 = params["conv_w"].reshape(K, KKC, Cout)
    w2 = jnp.pad(w2, ((0, 0), (0, 0), (0, Cp - Cout))).astype(compute_dtype)

    y, ss = se3_conv(P, w2, Do=Do, stride=stride, K=K)
    # y: (Do, BHW, Cp) f32;  ss: (Do, 1, Cp) per-plane channel sum-of-squares

    if relu:
        npix = Do * BHW
        ss_tot = ss.reshape(Do, Cp).sum(axis=0)        # (Cp,)
        # exact per-irrep-field segment sums (structure is static)
        parts, off = [], 0
        for mult, d in ((n1o, 1), (n3o, 3), (n5o, 5)):
            if mult > 0:
                blk = ss_tot[off:off + mult * d].reshape(mult, d).sum(axis=1)
                parts.append(jnp.repeat(blk, d))
                off += mult * d
        norm2 = jnp.concatenate(parts) / float(npix)   # E[|field|^2], (Cout,)
        inv = 1.0 / jnp.sqrt(norm2 + eps)
        scale_row = jnp.zeros((Cp,), jnp.float32).at[:Cout].set(inv)
        bias_row = jnp.zeros((Cp,), jnp.float32)
        if n1o > 0:
            bias_row = bias_row.at[:n1o].set(params["bias"][:n1o, 0])
        mask_np = np.zeros((Cp,), np.float32)
        mask_np[:n1o] = 1.0                            # bias+ReLU on scalars only
        y = bn_bias_relu_apply(y, scale_row.reshape(1, Cp),
                               bias_row.reshape(1, Cp),
                               jnp.asarray(mask_np).reshape(1, Cp))

    # (Do, B*Ho*Wo, Cp) -> (B, Cout, Do, Ho, Wo)
    y = y.reshape(Do, B, Ho, Wo, Cp)
    y = jnp.transpose(y, (1, 4, 0, 2, 3))[:, :Cout]
    return y


# ----------------------------------------------------------------------------
# Deterministic parameter init (shapes implied by the module's __init__)
# ----------------------------------------------------------------------------
def init_params(key, repr_in, repr_out, size=7):
    n1i, n3i, n5i = repr_in
    n1o, n3o, n5o = repr_out
    cin = n1i + 3 * n3i + 5 * n5i + (9 * n3i if n3i > 0 else 0)
    cout = n1o + 3 * n3o + 5 * n5o
    k1, k2 = jax.random.split(key)
    conv_w = jax.random.normal(k1, (size, size, size, cin, cout), jnp.float32)
    conv_w = conv_w / np.sqrt(size ** 3 * cin)
    bias = 0.1 * jax.random.normal(k2, (max(n1o, 1), 1), jnp.float32)
    return {"conv_w": conv_w, "bias": bias}


# ----------------------------------------------------------------------------
# Pure-JAX reference for the numerical cross-check
# ----------------------------------------------------------------------------
def block_forward_ref(x, params, repr_in, repr_out, relu=True, stride=1):
    n1i, n3i, n5i = repr_in
    n1o, n3o, n5o = repr_out
    B, C, D, H, W = x.shape
    if n3i > 0:
        x3 = x[:, n1i:n1i + 3 * n3i].reshape(B, n3i, 3, D, H, W)
        t = (x3[:, :, :, None] * x3[:, :, None, :]).reshape(B, n3i * 9, D, H, W)
        xt = jnp.concatenate([x, t], axis=1)
    else:
        xt = x
    xcl = jnp.transpose(xt, (0, 2, 3, 4, 1))
    y = jax.lax.conv_general_dilated(
        xcl, params["conv_w"], window_strides=(stride,) * 3,
        padding=[(3, 3)] * 3,
        dimension_numbers=("NDHWC", "DHWIO", "NDHWC"),
        precision=jax.lax.Precision.HIGHEST)
    Bo, Do, Ho, Wo, cout = y.shape
    if not relu:
        return jnp.transpose(y, (0, 4, 1, 2, 3))
    y2 = jnp.transpose(y, (4, 0, 1, 2, 3)).reshape(cout, -1)
    eps = 1e-5
    outs, off = [], 0
    for mult, d in ((n1o, 1), (n3o, 3), (n5o, 5)):
        for m in range(mult):
            rows = y2[off:off + d]
            norm2 = jnp.mean(jnp.sum(rows * rows, axis=0))
            rows = rows / jnp.sqrt(norm2 + eps)
            if d == 1:
                rows = jnp.maximum(rows + params["bias"][m], 0.0)
            outs.append(rows)
            off += d
    y2 = jnp.concatenate(outs, axis=0)
    return jnp.transpose(y2.reshape(cout, Bo, Do, Ho, Wo), (1, 0, 2, 3, 4))


if __name__ == "__main__":
    repr_in = (2, 2, 1)    # 2 scalar, 2 vector (dim 3), 1 dim-5 field -> C=13
    repr_out = (2, 2, 1)   # Cout = 13
    B, D, H, W = 2, 8, 8, 8
    cin = repr_in[0] + 3 * repr_in[1] + 5 * repr_in[2]

    key = jax.random.PRNGKey(0)
    kx, kp = jax.random.split(key)
    x = jax.random.normal(kx, (B, cin, D, H, W), jnp.float32)
    params = init_params(kp, repr_in, repr_out)

    # (stride, relu, compute_dtype, atol/rtol)
    configs = [
        (1, True, jnp.float32, 1e-3),    # tight check, f32 MXU path (v5e)
        (2, True, jnp.bfloat16, 5e-2),   # bf16 operands (v6e/v7x), strided
        (1, False, jnp.float32, 1e-3),   # conv-only path (no BN / ReLU)
    ]
    for stride, relu, cdt, tol in configs:
        fwd = jax.jit(functools.partial(
            block_forward, repr_in=repr_in, repr_out=repr_out,
            relu=relu, stride=stride, compute_dtype=cdt))
        out = jax.block_until_ready(fwd(x, params))
        ref = jax.block_until_ready(
            block_forward_ref(x, params, repr_in, repr_out,
                              relu=relu, stride=stride))
        assert out.shape == ref.shape, (out.shape, ref.shape)
        if not np.allclose(np.asarray(out), np.asarray(ref), atol=tol, rtol=tol):
            max_err = float(np.max(np.abs(np.asarray(out) - np.asarray(ref))))
            raise AssertionError(
                f"Pallas Block mismatch (stride={stride}, relu={relu}, "
                f"dtype={jnp.dtype(cdt).name}): max abs err {max_err}")

    print("KERNEL_OK")
</pallas_src>

<mosaic_0001>
module attributes {stable_mosaic.version = 11 : i64} {
  func.func @_conv_kernel(%arg0: i32, %arg1: i32, %arg2: memref<1x128x1519xf32, #tpu.memory_space<vmem>>, %arg3: memref<7x1519x128xf32, #tpu.memory_space<vmem>>, %arg4: memref<1x128x128xf32, #tpu.memory_space<vmem>>, %arg5: memref<1x1x128xf32, #tpu.memory_space<vmem>>, %arg6: memref<128x128xf32, #tpu.memory_space<vmem>>) attributes {dimension_semantics = [#tpu.dimension_semantics<parallel>, #tpu.dimension_semantics<arbitrary>], iteration_bounds = array<i64: 8, 7>, scalar_prefetch = 0 : i64, scratch_operands = 1 : i64, tpu.core_type = #tpu.core_type<tc>, window_params = [{transform_indices = @transform_0, window_bounds = array<i64: 1, 128, 1519>}, {pipeline_mode = #tpu.pipeline_mode<synchronous>, transform_indices = @transform_1, window_bounds = array<i64: 7, 1519, 128>}, {transform_indices = @transform_2, window_bounds = array<i64: 1, 128, 128>}, {transform_indices = @transform_3, window_bounds = array<i64: 1, 1, 128>}]} {
    %c0_i32 = arith.constant 0 : i32
    %0 = arith.cmpi eq, %arg1, %c0_i32 : i32
    %1 = arith.extui %0 : i1 to i32
    %c0_i32_0 = arith.constant 0 : i32
    %2 = arith.cmpi ne, %1, %c0_i32_0 : i32
    scf.if %2 {
      %cst_10 = arith.constant 0.000000e+00 : f32
      %15 = vector.broadcast %cst_10 : f32 to vector<128x128xf32>
      %c0_11 = arith.constant 0 : index
      %c0_12 = arith.constant 0 : index
      %16 = vector.load %arg6[%c0_11, %c0_12] : memref<128x128xf32, #tpu.memory_space<vmem>>, vector<128x128xf32>
      tpu.vector_store %arg6[%c0_11, %c0_12], %15 {strides = array<i32>} : memref<128x128xf32, #tpu.memory_space<vmem>>, vector<128x128xf32>,
    } else {
    }
    %c0 = arith.constant 0 : index
    %c0_1 = arith.constant 0 : index
    %3 = vector.load %arg6[%c0, %c0_1] : memref<128x128xf32, #tpu.memory_space<vmem>>, vector<128x128xf32>
    %c0_2 = arith.constant 0 : index
    %c0_3 = arith.constant 0 : index
    %c0_4 = arith.constant 0 : index
    %4 = vector.load %arg2[%c0_2, %c0_3, %c0_4] : memref<1x128x1519xf32, #tpu.memory_space<vmem>>, vector<1x128x1519xf32>
    %5 = vector.shape_cast %4 : vector<1x128x1519xf32> to vector<128x1519xf32>
    %6 = arith.index_cast %arg1 : i32 to index
    %c0_5 = arith.constant 0 : index
    %c0_6 = arith.constant 0 : index
    %7 = vector.load %arg3[%6, %c0_5, %c0_6] : memref<7x1519x128xf32, #tpu.memory_space<vmem>>, vector<1x1519x128xf32>
    %8 = vector.shape_cast %7 : vector<1x1519x128xf32> to vector<1519x128xf32>
    %cst = arith.constant dense<0.000000e+00> : vector<128x128xf32>
    %9 = tpu.matmul %5, %8, %cst {dimension_numbers = #tpu.dot_dimension_numbers<[1], [0], [0], [1], [0, 0, 1, 1], [], []>} : vector<128x1519xf32>, vector<1519x128xf32>, vector<128x128xf32> -> vector<128x128xf32>
    %10 = arith.addf %3, %9 : vector<128x128xf32>
    %c0_7 = arith.constant 0 : index
    %c0_8 = arith.constant 0 : index
    %11 = vector.load %arg6[%c0_7, %c0_8] : memref<128x128xf32, #tpu.memory_space<vmem>>, vector<128x128xf32>
    tpu.vector_store %arg6[%c0_7, %c0_8], %10 {strides = array<i32>} : memref<128x128xf32, #tpu.memory_space<vmem>>, vector<128x128xf32>,
    %c6_i32 = arith.constant 6 : i32
    %12 = arith.cmpi eq, %arg1, %c6_i32 : i32
    %13 = arith.extui %12 : i1 to i32
    %c0_i32_9 = arith.constant 0 : i32
    %14 = arith.cmpi ne, %13, %c0_i32_9 : i32
    scf.if %14 {
      %c0_10 = arith.constant 0 : index
      %c0_11 = arith.constant 0 : index
      %15 = vector.load %arg6[%c0_10, %c0_11] : memref<128x128xf32, #tpu.memory_space<vmem>>, vector<128x128xf32>
      %c0_12 = arith.constant 0 : index
      %c0_13 = arith.constant 0 : index
      %c0_14 = arith.constant 0 : index
      %16 = vector.load %arg4[%c0_12, %c0_13, %c0_14] : memref<1x128x128xf32, #tpu.memory_space<vmem>>, vector<1x128x128xf32>
      %17 = vector.shape_cast %16 : vector<1x128x128xf32> to vector<128x128xf32>
      %18 = vector.shape_cast %15 : vector<128x128xf32> to vector<1x128x128xf32>
      tpu.vector_store %arg4[%c0_12, %c0_13, %c0_14], %18 {strides = array<i32>} : memref<1x128x128xf32, #tpu.memory_space<vmem>>, vector<1x128x128xf32>,
      %19 = arith.mulf %15, %15 : vector<128x128xf32>
      %cst_15 = arith.constant dense<0.000000e+00> : vector<128xf32>
      %20 = vector.multi_reduction <add>, %19, %cst_15 [0] : vector<128x128xf32> to vector<128xf32>
      %21 = vector.shape_cast %20 : vector<128xf32> to vector<1x128xf32>
      %c0_16 = arith.constant 0 : index
      %c0_17 = arith.constant 0 : index
      %c0_18 = arith.constant 0 : index
      %22 = vector.load %arg5[%c0_16, %c0_17, %c0_18] : memref<1x1x128xf32, #tpu.memory_space<vmem>>, vector<1x1x128xf32>
      %23 = vector.shape_cast %22 : vector<1x1x128xf32> to vector<1x128xf32>
      %24 = vector.shape_cast %21 : vector<1x128xf32> to vector<1x1x128xf32>
      tpu.vector_store %arg5[%c0_16, %c0_17, %c0_18], %24 {strides = array<i32>} : memref<1x1x128xf32, #tpu.memory_space<vmem>>, vector<1x1x128xf32>,
    } else {
    }
    return
  }
  func.func @transform_0(%arg0: i32, %arg1: i32) -> (i32, i32, i32) {
    %c1_i32 = arith.constant 1 : i32
    %0 = arith.muli %arg0, %c1_i32 : i32
    %1 = arith.addi %0, %arg1 : i32
    %c0_i32 = arith.constant 0 : i32
    %c0_i32_0 = arith.constant 0 : i32
    %c0_i32_1 = arith.constant 0 : i32
    return %1, %c0_i32, %c0_i32_0 : i32, i32, i32
  }
  func.func @transform_1(%arg0: i32, %arg1: i32) -> (i32, i32, i32) {
    %c0_i32 = arith.constant 0 : i32
    %c0_i32_0 = arith.constant 0 : i32
    %c0_i32_1 = arith.constant 0 : i32
    %c0_i32_2 = arith.constant 0 : i32
    return %c0_i32, %c0_i32_0, %c0_i32_1 : i32, i32, i32
  }
  func.func @transform_2(%arg0: i32, %arg1: i32) -> (i32, i32, i32) {
    %c0_i32 = arith.constant 0 : i32
    %c0_i32_0 = arith.constant 0 : i32
    %c0_i32_1 = arith.constant 0 : i32
    return %arg0, %c0_i32, %c0_i32_0 : i32, i32, i32
  }
  func.func @transform_3(%arg0: i32, %arg1: i32) -> (i32, i32, i32) {
    %c0_i32 = arith.constant 0 : i32
    %c0_i32_0 = arith.constant 0 : i32
    %c0_i32_1 = arith.constant 0 : i32
    return %arg0, %c0_i32, %c0_i32_0 : i32, i32, i32
  }
}

module attributes {stable_mosaic.version = 11 : i64} {
  func.func @_bn_apply_kernel(%arg0: i32, %arg1: memref<1x128x128xf32, #tpu.memory_space<vmem>>, %arg2: memref<1x128xf32, #tpu.memory_space<vmem>>, %arg3: memref<1x128xf32, #tpu.memory_space<vmem>>, %arg4: memref<1x128xf32, #tpu.memory_space<vmem>>, %arg5: memref<1x128x128xf32, #tpu.memory_space<vmem>>) attributes {dimension_semantics = [#tpu.dimension_semantics<parallel>], iteration_bounds = array<i64: 8>, scalar_prefetch = 0 : i64, scratch_operands = 0 : i64, tpu.core_type = #tpu.core_type<tc>, window_params = [{transform_indices = @transform_0, window_bounds = array<i64: 1, 128, 128>}, {pipeline_mode = #tpu.pipeline_mode<synchronous>, transform_indices = @transform_1, window_bounds = array<i64: 1, 128>}, {pipeline_mode = #tpu.pipeline_mode<synchronous>, transform_indices = @transform_2, window_bounds = array<i64: 1, 128>}, {pipeline_mode = #tpu.pipeline_mode<synchronous>, transform_indices = @transform_3, window_bounds = array<i64: 1, 128>}, {transform_indices = @transform_4, window_bounds = array<i64: 1, 128, 128>}]} {
    %c0 = arith.constant 0 : index
    %c0_0 = arith.constant 0 : index
    %c0_1 = arith.constant 0 : index
    %0 = vector.load %arg1[%c0, %c0_0, %c0_1] : memref<1x128x128xf32, #tpu.memory_space<vmem>>, vector<1x128x128xf32>
    %c0_2 = arith.constant 0 : index
    %c0_3 = arith.constant 0 : index
    %1 = vector.load %arg2[%c0_2, %c0_3] : memref<1x128xf32, #tpu.memory_space<vmem>>, vector<1x128xf32>
    %2 = vector.shape_cast %1 : vector<1x128xf32> to vector<1x1x128xf32>
    %3 = vector.broadcast %2 : vector<1x1x128xf32> to vector<1x128x128xf32>
    %4 = arith.mulf %0, %3 : vector<1x128x128xf32>
    %c0_4 = arith.constant 0 : index
    %c0_5 = arith.constant 0 : index
    %5 = vector.load %arg3[%c0_4, %c0_5] : memref<1x128xf32, #tpu.memory_space<vmem>>, vector<1x128xf32>
    %6 = vector.shape_cast %5 : vector<1x128xf32> to vector<1x1x128xf32>
    %7 = vector.broadcast %6 : vector<1x1x128xf32> to vector<1x128x128xf32>
    %8 = arith.addf %4, %7 : vector<1x128x128xf32>
    %c0_6 = arith.constant 0 : index
    %c0_7 = arith.constant 0 : index
    %9 = vector.load %arg4[%c0_6, %c0_7] : memref<1x128xf32, #tpu.memory_space<vmem>>, vector<1x128xf32>
    %cst = arith.constant 0.000000e+00 : f32
    %10 = vector.broadcast %cst : f32 to vector<1x128xf32>
    %11 = arith.cmpf ogt, %9, %10 : vector<1x128xf32>
    %cst_8 = arith.constant 0.000000e+00 : f32
    %12 = vector.broadcast %cst_8 : f32 to vector<1x128x128xf32>
    %13 = arith.maximumf %8, %12 : vector<1x128x128xf32>
    %14 = vector.shape_cast %11 : vector<1x128xi1> to vector<1x1x128xi1>
    %15 = vector.broadcast %14 : vector<1x1x128xi1> to vector<1x128x128xi1>
    %16 = arith.select %15, %13, %4 : vector<1x128x128xi1>, vector<1x128x128xf32>
    %c0_9 = arith.constant 0 : index
    %c0_10 = arith.constant 0 : index
    %c0_11 = arith.constant 0 : index
    %17 = vector.load %arg5[%c0_9, %c0_10, %c0_11] : memref<1x128x128xf32, #tpu.memory_space<vmem>>, vector<1x128x128xf32>
    tpu.vector_store %arg5[%c0_9, %c0_10, %c0_11], %16 {strides = array<i32>} : memref<1x128x128xf32, #tpu.memory_space<vmem>>, vector<1x128x128xf32>,
    return
  }
  func.func @transform_0(%arg0: i32) -> (i32, i32, i32) {
    %c0_i32 = arith.constant 0 : i32
    %c0_i32_0 = arith.constant 0 : i32
    %c0_i32_1 = arith.constant 0 : i32
    return %arg0, %c0_i32, %c0_i32_0 : i32, i32, i32
  }
  func.func @transform_1(%arg0: i32) -> (i32, i32) {
    %c0_i32 = arith.constant 0 : i32
    %c0_i32_0 = arith.constant 0 : i32
    %c0_i32_1 = arith.constant 0 : i32
    return %c0_i32, %c0_i32_0 : i32, i32
  }
  func.func @transform_2(%arg0: i32) -> (i32, i32) {
    %c0_i32 = arith.constant 0 : i32
    %c0_i32_0 = arith.constant 0 : i32
    %c0_i32_1 = arith.constant 0 : i32
    return %c0_i32, %c0_i32_0 : i32, i32
  }
  func.func @transform_3(%arg0: i32) -> (i32, i32) {
    %c0_i32 = arith.constant 0 : i32
    %c0_i32_0 = arith.constant 0 : i32
    %c0_i32_1 = arith.constant 0 : i32
    return %c0_i32, %c0_i32_0 : i32, i32
  }
  func.func @transform_4(%arg0: i32) -> (i32, i32, i32) {
    %c0_i32 = arith.constant 0 : i32
    %c0_i32_0 = arith.constant 0 : i32
    %c0_i32_1 = arith.constant 0 : i32
    return %arg0, %c0_i32, %c0_i32_0 : i32, i32, i32
  }
}

</mosaic_0001>

<llo_original>
// kernel: block_forward.2
$region0: #{block_forward.2}
  #allocation0 [shape = 'u32[]', space=smem, size = 0x4, offset = 0x4, fixed_abs, tag = 'smem constant byte address 0x4 - core index']
  #allocation1 [shape = 'u32[144,128]{1,0:T(1,128)}', space=vmem, size = 0x12000, scoped, tag = 'internal scratch']
  #allocation2 [shape = 'f32[128,128]{1,0:T(8,128)}', space=vmem, size = 0x10000, scoped, tag = 'scratch operand']
  %s0 = inlined_call_operand.vmem [shape: f32[14,128,1519], index: 0, kind: input, shape index: {}]
  %s1 = inlined_call_operand.vmem [shape: f32[7,1519,128], index: 1, kind: input, shape index: {}]
  %s2 = inlined_call_operand.vmem [shape: f32[8,128,128], index: 2, kind: output, shape index: {0}]
  %s3 = inlined_call_operand.vmem [shape: f32[8,1,128], index: 3, kind: output, shape index: {1}]
  %4 = xla_tuple %s2, %s3
  %s5 = sld [smem:[#allocation0]]
  $region57: #{block_forward.2} parent=0
    _
  %s7 = ssub.s32 1, %s5
  %s8 = scalar_select 0, %s7, %s5
  loop: start=0, step=1, limit=58
  $region2: #{block_forward.2} parent=0 // loop_pre_header
    _
  $region3: #{block_forward.2} parent=0 // loop_header
    %s10 = sphi 0, %s14
    %p11 = scmp.ge.s32.totalorder %s10, 58
    %s17 = sphi 0, %s29
    %s18 = sphi 0, %s25
    %s19 = sphi 0, %s17
    %s20 = sphi 0, %s18
    %s21 = sphi 0, %s19
    %s22 = sphi 0, %s20
    %s34 = sphi 0, %s36
    %s37 = sphi 0, %s34
    %s38 = sphi 0, %s37
    %s54 = sphi 0, %s38
    %s58 = sphi 0, %s58
    %s60 = sphi 0, %s58
    %s61 = sphi 0, %s60
    %s75 = sphi 0, %s61
    %s81 = sphi 0, %s83
    %s84 = sphi 0, %s81
    %s85 = sphi 0, %s84
    %s101 = sphi 0, %s85
    %s107 = sphi 0, %s109
    %s110 = sphi 0, %s107
    %s111 = sphi 0, %s110
    %s127 = sphi 0, %s111
  $region4: #{block_forward.2} parent=0 // loop_header_branch
    %13 = sbr.rel (%p11) target = $region8
  $region5: #{block_forward.2} parent=0 // loop_body
    %s15 = ssub.s32 %s10, 1
    %s16 = ssub.s32 %s10, 2
    %s23 = sadd.s32 1, %s18
    %p24 = scmp.ge.s32.totalorder %s23, 7
    %s25 = scalar_select %p24, 0, %s23
    %s26 = sadd.s32 1, %s17
    %s27 = scalar_select %p24, %s26, %s17
    %p28 = scmp.ge.s32.totalorder %s27, 8
    %s29 = scalar_select %p28, 0, %s27
    %s30 = sadd.s32 %s17, %s18
    %s31 = sadd.s32 %s29, %s25
    %s32 = ssub.s32 %s30, %s31
    %p33 = scmp.eq.s32.totalorder %s32, 0
    %s35 = sadd.s32 %s34, 1
    %s36 = scalar_select %p33, %s34, %s35
    %p39 = pneg %p33
    %p40 = scmp.eq.s32.totalorder %s10, 55
    %p41 = por %p39, %p40
    %p42 = scmp.ne.s32.totalorder %s34, %s37
    %p43 = scmp.eq.s32.totalorder %s10, 0
    %p44 = por %p42, %p43
    %p45 = scmp.ne.s32.totalorder %s34, %s37
    %p46 = scmp.eq.s32.totalorder %s15, 55
    %p47 = por %p45, %p46
    %p48 = scmp.ne.s32.totalorder %s37, %s38
    %p49 = scmp.eq.s32.totalorder %s15, 0
    %p50 = por %p48, %p49
    %p51 = scmp.ne.s32.totalorder %s37, %s38
    %p52 = scmp.eq.s32.totalorder %s16, 55
    %p53 = por %p51, %p52
    %p55 = scmp.ne.s32.totalorder %s38, %s54
    %p56 = scmp.eq.s32.totalorder %s16, 0
    %p57 = por %p55, %p56
    %s59 = sadd.s32 %s58, 1
    %p62 = scmp.eq.s32.totalorder %s10, 55
    %p63 = scmp.ne.s32.totalorder %s58, %s60
    %p64 = scmp.eq.s32.totalorder %s10, 0
    %p65 = por %p63, %p64
    %p66 = scmp.ne.s32.totalorder %s58, %s60
    %p67 = scmp.eq.s32.totalorder %s15, 55
    %p68 = por %p66, %p67
    %p69 = scmp.ne.s32.totalorder %s60, %s61
    %p70 = scmp.eq.s32.totalorder %s15, 0
    %p71 = por %p69, %p70
    %p72 = scmp.ne.s32.totalorder %s60, %s61
    %p73 = scmp.eq.s32.totalorder %s16, 55
    %p74 = por %p72, %p73
    %p76 = scmp.ne.s32.totalorder %s61, %s75
    %p77 = scmp.eq.s32.totalorder %s16, 0
    %p78 = por %p76, %p77
    %s79 = ssub.s32 %s17, %s29
    %p80 = scmp.eq.s32.totalorder %s79, 0
    %s82 = sadd.s32 %s81, 1
    %s83 = scalar_select %p80, %s81, %s82
    %p86 = pneg %p80
    %p87 = scmp.eq.s32.totalorder %s10, 55
    %p88 = por %p86, %p87
    %p89 = scmp.ne.s32.totalorder %s81, %s84
    %p90 = scmp.eq.s32.totalorder %s10, 0
    %p91 = por %p89, %p90
    %p92 = scmp.ne.s32.totalorder %s81, %s84
    %p93 = scmp.eq.s32.totalorder %s15, 55
    %p94 = por %p92, %p93
    %p95 = scmp.ne.s32.totalorder %s84, %s85
    %p96 = scmp.eq.s32.totalorder %s15, 0
    %p97 = por %p95, %p96
    %p98 = scmp.ne.s32.totalorder %s84, %s85
    %p99 = scmp.eq.s32.totalorder %s16, 55
    %p100 = por %p98, %p99
    %p102 = scmp.ne.s32.totalorder %s85, %s101
    %p103 = scmp.eq.s32.totalorder %s16, 0
    %p104 = por %p102, %p103
    %s105 = ssub.s32 %s17, %s29
    %p106 = scmp.eq.s32.totalorder %s105, 0
    %s108 = sadd.s32 %s107, 1
    %s109 = scalar_select %p106, %s107, %s108
    %p112 = pneg %p106
    %p113 = scmp.eq.s32.totalorder %s10, 55
    %p114 = por %p112, %p113
    %p115 = scmp.ne.s32.totalorder %s107, %s110
    %p116 = scmp.eq.s32.totalorder %s10, 0
    %p117 = por %p115, %p116
    %p118 = scmp.ne.s32.totalorder %s107, %s110
    %p119 = scmp.eq.s32.totalorder %s15, 55
    %p120 = por %p118, %p119
    %p121 = scmp.ne.s32.totalorder %s110, %s111
    %p122 = scmp.eq.s32.totalorder %s15, 0
    %p123 = por %p121, %p122
    %p124 = scmp.ne.s32.totalorder %s110, %s111
    %p125 = scmp.eq.s32.totalorder %s16, 55
    %p126 = por %p124, %p125
    %p128 = scmp.ne.s32.totalorder %s111, %s127
    %p129 = scmp.eq.s32.totalorder %s16, 0
    %p130 = por %p128, %p129
    %p131 = scmp.le.s32.totalorder 1, %s10
    %p132 = scmp.lt.s32.totalorder %s10, 57
    %p133 = pnand %p131, %p132
    %p134 = pneg %p133
    // Predicated region
    $region9: #{block_forward.2} parent=5 // pred_check
      _
    $region10: #{block_forward.2} parent=5 // pred_check_branch
      %136 = sbr.rel (%p133) target = $region12
    $region11: #{block_forward.2} parent=5 // pred_region
      %s137 = ssub.s32 %s10, 1
      // Predicated region
      $region13: #{block_forward.2} parent=11 // pred_check
        %p138 = pneg %p71
      $region14: #{block_forward.2} parent=11 // pred_check_branch
        %140 = sbr.rel (%p138) target = $region16
      $region15: #{block_forward.2} parent=11 // pred_region
        _
      $region16: #{block_forward.2} parent=11 // pred_fallthru
        _
    $region12: #{block_forward.2} parent=5 // pred_fallthru
      _
    %p141 = scmp.lt.s32.totalorder %s10, 56
    // Predicated region
    $region17: #{block_forward.2} parent=5 // pred_check
      %p142 = pneg %p141
    $region18: #{block_forward.2} parent=5 // pred_check_branch
      %144 = sbr.rel (%p142) target = $region20
    $region19: #{block_forward.2} parent=5 // pred_region
      // Predicated region
      $region21: #{block_forward.2} parent=19 // pred_check
        %p145 = pneg %p44
      $region22: #{block_forward.2} parent=19 // pred_check_branch
        %147 = sbr.rel (%p145) target = $region24
      $region23: #{block_forward.2} parent=19 // pred_region
        %s148 = sadd.s32 %s17, %s18
        %p149 = scmp.lt.s32.totalorder %s148, 13
        %s150 = scalar_select %p149, %s148, 13
        %s151 = smul.addr %s150, 192
        %s152 = smul.addr %s151, 8
        %s153 = scalar_lea.vmem %s0, %s152
        %s154 = sadd.s32 %s17, %s18
      $region24: #{block_forward.2} parent=19 // pred_fallthru
        _
    $region20: #{block_forward.2} parent=5 // pred_fallthru
      _
    %p155 = scmp.le.s32.totalorder 1, %s10
    %p156 = scmp.lt.s32.totalorder %s10, 57
    %p157 = pnand %p155, %p156
    %p158 = pneg %p157
    // Predicated region
    $region25: #{block_forward.2} parent=5 // pred_check
      _
    $region26: #{block_forward.2} parent=5 // pred_check_branch
      %160 = sbr.rel (%p157) target = $region28
    $region27: #{block_forward.2} parent=5 // pred_region
      %s161 = ssub.s32 %s10, 1
      %s162 = sadd.s32 %s19, %s20
      %p163 = scmp.lt.s32.totalorder %s162, 13
      %s164 = scalar_select %p163, %s162, 13
      %s165 = smul.addr %s164, 192
      %s166 = smul.addr %s165, 8
      %s167 = scalar_lea.vmem %s0, %s166
      %p168 = pneg %p50
      %p169 = pneg %p47
      %p170 = pneg %p71
      %p171 = pneg %p68
      %p172 = pneg %p97
      %p173 = pneg %p94
      %p174 = scmp.lt.s32.totalorder %s19, 7
      %s175 = scalar_select %p174, %s19, 7
      %s176 = smul.addr %s175, 16
      %s177 = smul.addr %s176, 8
      %s178 = scalar_lea.vmem %s2, %s177
      %p179 = pneg %p123
      %p180 = pneg %p120
      %p181 = scmp.lt.s32.totalorder %s19, 7
      %s182 = scalar_select %p181, %s19, 7
      %s183 = scalar_lea.vmem %s3, %s182
      %s184 = sadd.s32 %s19, %s20
      %p185 = scmp.lt.s32.totalorder %s184, 13
      %s186 = scalar_select %p185, %s184, 13
      %s187 = smul.addr %s186, 192
      %s188 = smul.addr %s187, 8
      %s189 = scalar_lea.vmem %s0, %s188
      %s190 = sadd.s32 %s19, %s20
      %p191 = scmp.lt.s32.totalorder %s19, 7
      %s192 = scalar_select %p191, %s19, 7
      %s193 = smul.addr %s192, 16
      %s194 = smul.addr %s193, 8
      %s195 = scalar_lea.vmem %s2, %s194
      %p196 = scmp.lt.s32.totalorder %s19, 7
      %s197 = scalar_select %p196, %s19, 7
      %s198 = scalar_lea.vmem %s3, %s197
      %p199 = scmp.eq.s32.totalorder %s20, 0
      // Predicated region
      $region29: #{block_forward.2} parent=27 // pred_check
        %p200 = pneg %p199
      $region30: #{block_forward.2} parent=27 // pred_check_branch
        %202 = sbr.rel (%p200) target = $region32
      $region31: #{block_forward.2} parent=27 // pred_region
        %203 = vst [vmem:[#allocation2] sm:$0xff] 0.0
        %204 = vst [vmem:[#allocation2 + $0x8] sm:$0xff] 0.0
        %205 = vst [vmem:[#allocation2 + $0x10] sm:$0xff] 0.0
        %206 = vst [vmem:[#allocation2 + $0x18] sm:$0xff] 0.0
        %207 = vst [vmem:[#allocation2 + $0x20] sm:$0xff] 0.0
        %208 = vst [vmem:[#allocation2 + $0x28] sm:$0xff] 0.0
        %209 = vst [vmem:[#allocation2 + $0x30] sm:$0xff] 0.0
        %210 = vst [vmem:[#allocation2 + $0x38] sm:$0xff] 0.0
        %211 = vst [vmem:[#allocation2 + $0x40] sm:$0xff] 0.0
        %212 = vst [vmem:[#allocation2 + $0x48] sm:$0xff] 0.0
        %213 = vst [vmem:[#allocation2 + $0x50] sm:$0xff] 0.0
        %214 = vst [vmem:[#allocation2 + $0x58] sm:$0xff] 0.0
        %215 = vst [vmem:[#allocation2 + $0x60] sm:$0xff] 0.0
        %216 = vst [vmem:[#allocation2 + $0x68] sm:$0xff] 0.0
        %217 = vst [vmem:[#allocation2 + $0x70] sm:$0xff] 0.0
        %218 = vst [vmem:[#allocation2 + $0x78] sm:$0xff] 0.0
      $region32: #{block_forward.2} parent=27 // pred_fallthru
        _
      %v219 = vld [vmem:[#allocation2] sm:$0xff]
      %v220 = vld [vmem:[#allocation2 + $0x8] sm:$0xff]
      %v221 = vld [vmem:[#allocation2 + $0x10] sm:$0xff]
      %v222 = vld [vmem:[#allocation2 + $0x18] sm:$0xff]
      %v223 = vld [vmem:[#allocation2 + $0x20] sm:$0xff]
      %v224 = vld [vmem:[#allocation2 + $0x28] sm:$0xff]
      %v225 = vld [vmem:[#allocation2 + $0x30] sm:$0xff]
      %v226 = vld [vmem:[#allocation2 + $0x38] sm:$0xff]
      %v227 = vld [vmem:[#allocation2 + $0x40] sm:$0xff]
      %v228 = vld [vmem:[#allocation2 + $0x48] sm:$0xff]
      %v229 = vld [vmem:[#allocation2 + $0x50] sm:$0xff]
      %v230 = vld [vmem:[#allocation2 + $0x58] sm:$0xff]
      %v231 = vld [vmem:[#allocation2 + $0x60] sm:$0xff]
      %v232 = vld [vmem:[#allocation2 + $0x68] sm:$0xff]
      %v233 = vld [vmem:[#allocation2 + $0x70] sm:$0xff]
      %v234 = vld [vmem:[#allocation2 + $0x78] sm:$0xff]
      %v235 = vld [vmem:[%s189] sm:$0xff]
      %v236 = vld [vmem:[%s189 + $0x8] sm:$0xff]
      %v237 = vld [vmem:[%s189 + $0x10] sm:$0xff]
      %v238 = vld [vmem:[%s189 + $0x18] sm:$0xff]
      %v239 = vld [vmem:[%s189 + $0x20] sm:$0xff]
      %v240 = vld [vmem:[%s189 + $0x28] sm:$0xff]
      %v241 = vld [vmem:[%s189 + $0x30] sm:$0xff]
      %v242 = vld [vmem:[%s189 + $0x38] sm:$0xff]
      %v243 = vld [vmem:[%s189 + $0x40] sm:$0xff]
      %v244 = vld [vmem:[%s189 + $0x48] sm:$0xff]
      %v245 = vld [vmem:[%s189 + $0x50] sm:$0xff]
      %v246 = vld [vmem:[%s189 + $0x58] sm:$0xff]
      %v247 = vld [vmem:[%s189 + $0x60] sm:$0xff]
      %v248 = vld [vmem:[%s189 + $0x68] sm:$0xff]
      %v249 = vld [vmem:[%s189 + $0x70] sm:$0xff]
      %v250 = vld [vmem:[%s189 + $0x78] sm:$0xff]
      %v251 = vld [vmem:[%s189 + $0x80] sm:$0xff]
      %v252 = vld [vmem:[%s189 + $0x88] sm:$0xff]
      %v253 = vld [vmem:[%s189 + $0x90] sm:$0xff]
      %v254 = vld [vmem:[%s189 + $0x98] sm:$0xff]
      %v255 = vld [vmem:[%s189 + $0xa0] sm:$0xff]
      %v256 = vld [vmem:[%s189 + $0xa8] sm:$0xff]
      %v257 = vld [vmem:[%s189 + $0xb0] sm:$0xff]
      %v258 = vld [vmem:[%s189 + $0xb8] sm:$0xff]
      %v259 = vld [vmem:[%s189 + $0xc0] sm:$0xff]
      %v260 = vld [vmem:[%s189 + $0xc8] sm:$0xff]
      %v261 = vld [vmem:[%s189 + $0xd0] sm:$0xff]
      %v262 = vld [vmem:[%s189 + $0xd8] sm:$0xff]
      %v263 = vld [vmem:[%s189 + $0xe0] sm:$0xff]
      %v264 = vld [vmem:[%s189 + $0xe8] sm:$0xff]
      %v265 = vld [vmem:[%s189 + $0xf0] sm:$0xff]
      %v266 = vld [vmem:[%s189 + $0xf8] sm:$0xff]
      %v267 = vld [vmem:[%s189 + $0x100] sm:$0xff]
      %v268 = vld [vmem:[%s189 + $0x108] sm:$0xff]
      %v269 = vld [vmem:[%s189 + $0x110] sm:$0xff]
      %v270 = vld [vmem:[%s189 + $0x118] sm:$0xff]
      %v271 = vld [vmem:[%s189 + $0x120] sm:$0xff]
      %v272 = vld [vmem:[%s189 + $0x128] sm:$0xff]
      %v273 = vld [vmem:[%s189 + $0x130] sm:$0xff]
      %v274 = vld [vmem:[%s189 + $0x138] sm:$0xff]
      %v275 = vld [vmem:[%s189 + $0x140] sm:$0xff]
      %v276 = vld [vmem:[%s189 + $0x148] sm:$0xff]
      %v277 = vld [vmem:[%s189 + $0x150] sm:$0xff]
      %v278 = vld [vmem:[%s189 + $0x158] sm:$0xff]
      %v279 = vld [vmem:[%s189 + $0x160] sm:$0xff]
      %v280 = vld [vmem:[%s189 + $0x168] sm:$0xff]
      %v281 = vld [vmem:[%s189 + $0x170] sm:$0xff]
      %v282 = vld [vmem:[%s189 + $0x178] sm:$0xff]
      %v283 = vld [vmem:[%s189 + $0x180] sm:$0xff]
      %v284 = vld [vmem:[%s189 + $0x188] sm:$0xff]
      %v285 = vld [vmem:[%s189 + $0x190] sm:$0xff]
      %v286 = vld [vmem:[%s189 + $0x198] sm:$0xff]
      %v287 = vld [vmem:[%s189 + $0x1a0] sm:$0xff]
      %v288 = vld [vmem:[%s189 + $0x1a8] sm:$0xff]
      %v289 = vld [vmem:[%s189 + $0x1b0] sm:$0xff]
      %v290 = vld [vmem:[%s189 + $0x1b8] sm:$0xff]
      %v291 = vld [vmem:[%s189 + $0x1c0] sm:$0xff]
      %v292 = vld [vmem:[%s189 + $0x1c8] sm:$0xff]
      %v293 = vld [vmem:[%s189 + $0x1d0] sm:$0xff]
      %v294 = vld [vmem:[%s189 + $0x1d8] sm:$0xff]
      %v295 = vld [vmem:[%s189 + $0x1e0] sm:$0xff]
      %v296 = vld [vmem:[%s189 + $0x1e8] sm:$0xff]
      %v297 = vld [vmem:[%s189 + $0x1f0] sm:$0xff]
      %v298 = vld [vmem:[%s189 + $0x1f8] sm:$0xff]
      %v299 = vld [vmem:[%s189 + $0x200] sm:$0xff]
      %v300 = vld [vmem:[%s189 + $0x208] sm:$0xff]
      %v301 = vld [vmem:[%s189 + $0x210] sm:$0xff]
      %v302 = vld [vmem:[%s189 + $0x218] sm:$0xff]
      %v303 = vld [vmem:[%s189 + $0x220] sm:$0xff]
      %v304 = vld [vmem:[%s189 + $0x228] sm:$0xff]
      %v305 = vld [vmem:[%s189 + $0x230] sm:$0xff]
      %v306 = vld [vmem:[%s189 + $0x238] sm:$0xff]
      %v307 = vld [vmem:[%s189 + $0x240] sm:$0xff]
      %v308 = vld [vmem:[%s189 + $0x248] sm:$0xff]
      %v309 = vld [vmem:[%s189 + $0x250] sm:$0xff]
      %v310 = vld [vmem:[%s189 + $0x258] sm:$0xff]
      %v311 = vld [vmem:[%s189 + $0x260] sm:$0xff]
      %v312 = vld [vmem:[%s189 + $0x268] sm:$0xff]
      %v313 = vld [vmem:[%s189 + $0x270] sm:$0xff]
      %v314 = vld [vmem:[%s189 + $0x278] sm:$0xff]
      %v315 = vld [vmem:[%s189 + $0x280] sm:$0xff]
      %v316 = vld [vmem:[%s189 + $0x288] sm:$0xff]
      %v317 = vld [vmem:[%s189 + $0x290] sm:$0xff]
      %v318 = vld [vmem:[%s189 + $0x298] sm:$0xff]
      %v319 = vld [vmem:[%s189 + $0x2a0] sm:$0xff]
      %v320 = vld [vmem:[%s189 + $0x2a8] sm:$0xff]
      %v321 = vld [vmem:[%s189 + $0x2b0] sm:$0xff]
      %v322 = vld [vmem:[%s189 + $0x2b8] sm:$0xff]
      %v323 = vld [vmem:[%s189 + $0x2c0] sm:$0xff]
      %v324 = vld [vmem:[%s189 + $0x2c8] sm:$0xff]
      %v325 = vld [vmem:[%s189 + $0x2d0] sm:$0xff]
      %v326 = vld [vmem:[%s189 + $0x2d8] sm:$0xff]
      %v327 = vld [vmem:[%s189 + $0x2e0] sm:$0xff]
      %v328 = vld [vmem:[%s189 + $0x2e8] sm:$0xff]
      %v329 = vld [vmem:[%s189 + $0x2f0] sm:$0xff]
      %v330 = vld [vmem:[%s189 + $0x2f8] sm:$0xff]
      %v331 = vld [vmem:[%s189 + $0x300] sm:$0xff]
      %v332 = vld [vmem:[%s189 + $0x308] sm:$0xff]
      %v333 = vld [vmem:[%s189 + $0x310] sm:$0xff]
      %v334 = vld [vmem:[%s189 + $0x318] sm:$0xff]
      %v335 = vld [vmem:[%s189 + $0x320] sm:$0xff]
      %v336 = vld [vmem:[%s189 + $0x328] sm:$0xff]
      %v337 = vld [vmem:[%s189 + $0x330] sm:$0xff]
      %v338 = vld [vmem:[%s189 + $0x338] sm:$0xff]
      %v339 = vld [vmem:[%s189 + $0x340] sm:$0xff]
      %v340 = vld [vmem:[%s189 + $0x348] sm:$0xff]
      %v341 = vld [vmem:[%s189 + $0x350] sm:$0xff]
      %v342 = vld [vmem:[%s189 + $0x358] sm:$0xff]
      %v343 = vld [vmem:[%s189 + $0x360] sm:$0xff]
      %v344 = vld [vmem:[%s189 + $0x368] sm:$0xff]
      %v345 = vld [vmem:[%s189 + $0x370] sm:$0xff]
      %v346 = vld [vmem:[%s189 + $0x378] sm:$0xff]
      %v347 = vld [vmem:[%s189 + $0x380] sm:$0xff]
      %v348 = vld [vmem:[%s189 + $0x388] sm:$0xff]
      %v349 = vld [vmem:[%s189 + $0x390] sm:$0xff]
      %v350 = vld [vmem:[%s189 + $0x398] sm:$0xff]
      %v351 = vld [vmem:[%s189 + $0x3a0] sm:$0xff]
      %v352 = vld [vmem:[%s189 + $0x3a8] sm:$0xff]
      %v353 = vld [vmem:[%s189 + $0x3b0] sm:$0xff]
      %v354 = vld [vmem:[%s189 + $0x3b8] sm:$0xff]
      %v355 = vld [vmem:[%s189 + $0x3c0] sm:$0xff]
      %v356 = vld [vmem:[%s189 + $0x3c8] sm:$0xff]
      %v357 = vld [vmem:[%s189 + $0x3d0] sm:$0xff]
      %v358 = vld [vmem:[%s189 + $0x3d8] sm:$0xff]
      %v359 = vld [vmem:[%s189 + $0x3e0] sm:$0xff]
      %v360 = vld [vmem:[%s189 + $0x3e8] sm:$0xff]
      %v361 = vld [vmem:[%s189 + $0x3f0] sm:$0xff]
      %v362 = vld [vmem:[%s189 + $0x3f8] sm:$0xff]
      %v363 = vld [vmem:[%s189 + $0x400] sm:$0xff]
      %v364 = vld [vmem:[%s189 + $0x408] sm:$0xff]
      %v365 = vld [vmem:[%s189 + $0x410] sm:$0xff]
      %v366 = vld [vmem:[%s189 + $0x418] sm:$0xff]
      %v367 = vld [vmem:[%s189 + $0x420] sm:$0xff]
      %v368 = vld [vmem:[%s189 + $0x428] sm:$0xff]
      %v369 = vld [vmem:[%s189 + $0x430] sm:$0xff]
      %v370 = vld [vmem:[%s189 + $0x438] sm:$0xff]
      %v371 = vld [vmem:[%s189 + $0x440] sm:$0xff]
      %v372 = vld [vmem:[%s189 + $0x448] sm:$0xff]
      %v373 = vld [vmem:[%s189 + $0x450] sm:$0xff]
      %v374 = vld [vmem:[%s189 + $0x458] sm:$0xff]
      %v375 = vld [vmem:[%s189 + $0x460] sm:$0xff]
      %v376 = vld [vmem:[%s189 + $0x468] sm:$0xff]
      %v377 = vld [vmem:[%s189 + $0x470] sm:$0xff]
      %v378 = vld [vmem:[%s189 + $0x478] sm:$0xff]
      %v379 = vld [vmem:[%s189 + $0x480] sm:$0xff]
      %v380 = vld [vmem:[%s189 + $0x488] sm:$0xff]
      %v381 = vld [vmem:[%s189 + $0x490] sm:$0xff]
      %v382 = vld [vmem:[%s189 + $0x498] sm:$0xff]
      %v383 = vld [vmem:[%s189 + $0x4a0] sm:$0xff]
      %v384 = vld [vmem:[%s189 + $0x4a8] sm:$0xff]
      %v385 = vld [vmem:[%s189 + $0x4b0] sm:$0xff]
      %v386 = vld [vmem:[%s189 + $0x4b8] sm:$0xff]
      %v387 = vld [vmem:[%s189 + $0x4c0] sm:$0xff]
      %v388 = vld [vmem:[%s189 + $0x4c8] sm:$0xff]
      %v389 = vld [vmem:[%s189 + $0x4d0] sm:$0xff]
      %v390 = vld [vmem:[%s189 + $0x4d8] sm:$0xff]
      %v391 = vld [vmem:[%s189 + $0x4e0] sm:$0xff]
      %v392 = vld [vmem:[%s189 + $0x4e8] sm:$0xff]
      %v393 = vld [vmem:[%s189 + $0x4f0] sm:$0xff]
      %v394 = vld [vmem:[%s189 + $0x4f8] sm:$0xff]
      %v395 = vld [vmem:[%s189 + $0x500] sm:$0xff]
      %v396 = vld [vmem:[%s189 + $0x508] sm:$0xff]
      %v397 = vld [vmem:[%s189 + $0x510] sm:$0xff]
      %v398 = vld [vmem:[%s189 + $0x518] sm:$0xff]
      %v399 = vld [vmem:[%s189 + $0x520] sm:$0xff]
      %v400 = vld [vmem:[%s189 + $0x528] sm:$0xff]
      %v401 = vld [vmem:[%s189 + $0x530] sm:$0xff]
      %v402 = vld [vmem:[%s189 + $0x538] sm:$0xff]
      %v403 = vld [vmem:[%s189 + $0x540] sm:$0xff]
      %v404 = vld [vmem:[%s189 + $0x548] sm:$0xff]
      %v405 = vld [vmem:[%s189 + $0x550] sm:$0xff]
      %v406 = vld [vmem:[%s189 + $0x558] sm:$0xff]
      %v407 = vld [vmem:[%s189 + $0x560] sm:$0xff]
      %v408 = vld [vmem:[%s189 + $0x568] sm:$0xff]
      %v409 = vld [vmem:[%s189 + $0x570] sm:$0xff]
      %v410 = vld [vmem:[%s189 + $0x578] sm:$0xff]
      %v411 = vld [vmem:[%s189 + $0x580] sm:$0xff]
      %v412 = vld [vmem:[%s189 + $0x588] sm:$0xff]
      %v413 = vld [vmem:[%s189 + $0x590] sm:$0xff]
      %v414 = vld [vmem:[%s189 + $0x598] sm:$0xff]
      %v415 = vld [vmem:[%s189 + $0x5a0] sm:$0xff]
      %v416 = vld [vmem:[%s189 + $0x5a8] sm:$0xff]
      %v417 = vld [vmem:[%s189 + $0x5b0] sm:$0xff]
      %v418 = vld [vmem:[%s189 + $0x5b8] sm:$0xff]
      %v419 = vld [vmem:[%s189 + $0x5c0] sm:$0xff]
      %v420 = vld [vmem:[%s189 + $0x5c8] sm:$0xff]
      %v421 = vld [vmem:[%s189 + $0x5d0] sm:$0xff]
      %v422 = vld [vmem:[%s189 + $0x5d8] sm:$0xff]
      %v423 = vld [vmem:[%s189 + $0x5e0] sm:$0xff]
      %v424 = vld [vmem:[%s189 + $0x5e8] sm:$0xff]
      %v425 = vld [vmem:[%s189 + $0x5f0] sm:$0xff]
      %v426 = vld [vmem:[%s189 + $0x5f8] sm:$0xff]
      %s427 = smul.u32 %s20, 1520
      %s428 = scalar_lea.vmem %s1, %s427
      %v429 = vld [vmem:[%s428] sm:$0xff]
      %v430 = vld [vmem:[%s428 + $0x8] sm:$0xff]
      %v431 = vld [vmem:[%s428 + $0x10] sm:$0xff]
      %v432 = vld [vmem:[%s428 + $0x18] sm:$0xff]
      %v433 = vld [vmem:[%s428 + $0x20] sm:$0xff]
      %v434 = vld [vmem:[%s428 + $0x28] sm:$0xff]
      %v435 = vld [vmem:[%s428 + $0x30] sm:$0xff]
      %v436 = vld [vmem:[%s428 + $0x38] sm:$0xff]
      %v437 = vld [vmem:[%s428 + $0x40] sm:$0xff]
      %v438 = vld [vmem:[%s428 + $0x48] sm:$0xff]
      %v439 = vld [vmem:[%s428 + $0x50] sm:$0xff]
      %v440 = vld [vmem:[%s428 + $0x58] sm:$0xff]
      %v441 = vld [vmem:[%s428 + $0x60] sm:$0xff]
      %v442 = vld [vmem:[%s428 + $0x68] sm:$0xff]
      %v443 = vld [vmem:[%s428 + $0x70] sm:$0xff]
      %v444 = vld [vmem:[%s428 + $0x78] sm:$0xff]
      %v445 = vld [vmem:[%s428 + $0x80] sm:$0xff]
      %v446 = vld [vmem:[%s428 + $0x88] sm:$0xff]
      %v447 = vld [vmem:[%s428 + $0x90] sm:$0xff]
      %v448 = vld [vmem:[%s428 + $0x98] sm:$0xff]
      %v449 = vld [vmem:[%s428 + $0xa0] sm:$0xff]
      %v450 = vld [vmem:[%s428 + $0xa8] sm:$0xff]
      %v451 = vld [vmem:[%s428 + $0xb0] sm:$0xff]
      %v452 = vld [vmem:[%s428 + $0xb8] sm:$0xff]
      %v453 = vld [vmem:[%s428 + $0xc0] sm:$0xff]
      %v454 = vld [vmem:[%s428 + $0xc8] sm:$0xff]
      %v455 = vld [vmem:[%s428 + $0xd0] sm:$0xff]
      %v456 = vld [vmem:[%s428 + $0xd8] sm:$0xff]
      %v457 = vld [vmem:[%s428 + $0xe0] sm:$0xff]
      %v458 = vld [vmem:[%s428 + $0xe8] sm:$0xff]
      %v459 = vld [vmem:[%s428 + $0xf0] sm:$0xff]
      %v460 = vld [vmem:[%s428 + $0xf8] sm:$0xff]
      %v461 = vld [vmem:[%s428 + $0x100] sm:$0xff]
      %v462 = vld [vmem:[%s428 + $0x108] sm:$0xff]
      %v463 = vld [vmem:[%s428 + $0x110] sm:$0xff]
      %v464 = vld [vmem:[%s428 + $0x118] sm:$0xff]
      %v465 = vld [vmem:[%s428 + $0x120] sm:$0xff]
      %v466 = vld [vmem:[%s428 + $0x128] sm:$0xff]
      %v467 = vld [vmem:[%s428 + $0x130] sm:$0xff]
      %v468 = vld [vmem:[%s428 + $0x138] sm:$0xff]
      %v469 = vld [vmem:[%s428 + $0x140] sm:$0xff]
      %v470 = vld [vmem:[%s428 + $0x148] sm:$0xff]
      %v471 = vld [vmem:[%s428 + $0x150] sm:$0xff]
      %v472 = vld [vmem:[%s428 + $0x158] sm:$0xff]
      %v473 = vld [vmem:[%s428 + $0x160] sm:$0xff]
      %v474 = vld [vmem:[%s428 + $0x168] sm:$0xff]
      %v475 = vld [vmem:[%s428 + $0x170] sm:$0xff]
      %v476 = vld [vmem:[%s428 + $0x178] sm:$0xff]
      %v477 = vld [vmem:[%s428 + $0x180] sm:$0xff]
      %v478 = vld [vmem:[%s428 + $0x188] sm:$0xff]
      %v479 = vld [vmem:[%s428 + $0x190] sm:$0xff]
      %v480 = vld [vmem:[%s428 + $0x198] sm:$0xff]
      %v481 = vld [vmem:[%s428 + $0x1a0] sm:$0xff]
      %v482 = vld [vmem:[%s428 + $0x1a8] sm:$0xff]
      %v483 = vld [vmem:[%s428 + $0x1b0] sm:$0xff]
      %v484 = vld [vmem:[%s428 + $0x1b8] sm:$0xff]
      %v485 = vld [vmem:[%s428 + $0x1c0] sm:$0xff]
      %v486 = vld [vmem:[%s428 + $0x1c8] sm:$0xff]
      %v487 = vld [vmem:[%s428 + $0x1d0] sm:$0xff]
      %v488 = vld [vmem:[%s428 + $0x1d8] sm:$0xff]
      %v489 = vld [vmem:[%s428 + $0x1e0] sm:$0xff]
      %v490 = vld [vmem:[%s428 + $0x1e8] sm:$0xff]
      %v491 = vld [vmem:[%s428 + $0x1f0] sm:$0xff]
      %v492 = vld [vmem:[%s428 + $0x1f8] sm:$0xff]
      %v493 = vld [vmem:[%s428 + $0x200] sm:$0xff]
      %v494 = vld [vmem:[%s428 + $0x208] sm:$0xff]
      %v495 = vld [vmem:[%s428 + $0x210] sm:$0xff]
      %v496 = vld [vmem:[%s428 + $0x218] sm:$0xff]
      %v497 = vld [vmem:[%s428 + $0x220] sm:$0xff]
      %v498 = vld [vmem:[%s428 + $0x228] sm:$0xff]
      %v499 = vld [vmem:[%s428 + $0x230] sm:$0xff]
      %v500 = vld [vmem:[%s428 + $0x238] sm:$0xff]
      %v501 = vld [vmem:[%s428 + $0x240] sm:$0xff]
      %v502 = vld [vmem:[%s428 + $0x248] sm:$0xff]
      %v503 = vld [vmem:[%s428 + $0x250] sm:$0xff]
      %v504 = vld [vmem:[%s428 + $0x258] sm:$0xff]
      %v505 = vld [vmem:[%s428 + $0x260] sm:$0xff]
      %v506 = vld [vmem:[%s428 + $0x268] sm:$0xff]
      %v507 = vld [vmem:[%s428 + $0x270] sm:$0xff]
      %v508 = vld [vmem:[%s428 + $0x278] sm:$0xff]
      %v509 = vld [vmem:[%s428 + $0x280] sm:$0xff]
      %v510 = vld [vmem:[%s428 + $0x288] sm:$0xff]
      %v511 = vld [vmem:[%s428 + $0x290] sm:$0xff]
      %v512 = vld [vmem:[%s428 + $0x298] sm:$0xff]
      %v513 = vld [vmem:[%s428 + $0x2a0] sm:$0xff]
      %v514 = vld [vmem:[%s428 + $0x2a8] sm:$0xff]
      %v515 = vld [vmem:[%s428 + $0x2b0] sm:$0xff]
      %v516 = vld [vmem:[%s428 + $0x2b8] sm:$0xff]
      %v517 = vld [vmem:[%s428 + $0x2c0] sm:$0xff]
      %v518 = vld [vmem:[%s428 + $0x2c8] sm:$0xff]
      %v519 = vld [vmem:[%s428 + $0x2d0] sm:$0xff]
      %v520 = vld [vmem:[%s428 + $0x2d8] sm:$0xff]
      %v521 = vld [vmem:[%s428 + $0x2e0] sm:$0xff]
      %v522 = vld [vmem:[%s428 + $0x2e8] sm:$0xff]
      %v523 = vld [vmem:[%s428 + $0x2f0] sm:$0xff]
      %v524 = vld [vmem:[%s428 + $0x2f8] sm:$0xff]
      %v525 = vld [vmem:[%s428 + $0x300] sm:$0xff]
      %v526 = vld [vmem:[%s428 + $0x308] sm:$0xff]
      %v527 = vld [vmem:[%s428 + $0x310] sm:$0xff]
      %v528 = vld [vmem:[%s428 + $0x318] sm:$0xff]
      %v529 = vld [vmem:[%s428 + $0x320] sm:$0xff]
      %v530 = vld [vmem:[%s428 + $0x328] sm:$0xff]
      %v531 = vld [vmem:[%s428 + $0x330] sm:$0xff]
      %v532 = vld [vmem:[%s428 + $0x338] sm:$0xff]
      %v533 = vld [vmem:[%s428 + $0x340] sm:$0xff]
      %v534 = vld [vmem:[%s428 + $0x348] sm:$0xff]
      %v535 = vld [vmem:[%s428 + $0x350] sm:$0xff]
      %v536 = vld [vmem:[%s428 + $0x358] sm:$0xff]
      %v537 = vld [vmem:[%s428 + $0x360] sm:$0xff]
      %v538 = vld [vmem:[%s428 + $0x368] sm:$0xff]
      %v539 = vld [vmem:[%s428 + $0x370] sm:$0xff]
      %v540 = vld [vmem:[%s428 + $0x378] sm:$0xff]
      %v541 = vld [vmem:[%s428 + $0x380] sm:$0xff]
      %v542 = vld [vmem:[%s428 + $0x388] sm:$0xff]
      %v543 = vld [vmem:[%s428 + $0x390] sm:$0xff]
      %v544 = vld [vmem:[%s428 + $0x398] sm:$0xff]
      %v545 = vld [vmem:[%s428 + $0x3a0] sm:$0xff]
      %v546 = vld [vmem:[%s428 + $0x3a8] sm:$0xff]
      %v547 = vld [vmem:[%s428 + $0x3b0] sm:$0xff]
      %v548 = vld [vmem:[%s428 + $0x3b8] sm:$0xff]
      %v549 = vld [vmem:[%s428 + $0x3c0] sm:$0xff]
      %v550 = vld [vmem:[%s428 + $0x3c8] sm:$0xff]
      %v551 = vld [vmem:[%s428 + $0x3d0] sm:$0xff]
      %v552 = vld [vmem:[%s428 + $0x3d8] sm:$0xff]
      %v553 = vld [vmem:[%s428 + $0x3e0] sm:$0xff]
      %v554 = vld [vmem:[%s428 + $0x3e8] sm:$0xff]
      %v555 = vld [vmem:[%s428 + $0x3f0] sm:$0xff]
      %v556 = vld [vmem:[%s428 + $0x3f8] sm:$0xff]
      %v557 = vld [vmem:[%s428 + $0x400] sm:$0xff]
      %v558 = vld [vmem:[%s428 + $0x408] sm:$0xff]
      %v559 = vld [vmem:[%s428 + $0x410] sm:$0xff]
      %v560 = vld [vmem:[%s428 + $0x418] sm:$0xff]
      %v561 = vld [vmem:[%s428 + $0x420] sm:$0xff]
      %v562 = vld [vmem:[%s428 + $0x428] sm:$0xff]
      %v563 = vld [vmem:[%s428 + $0x430] sm:$0xff]
      %v564 = vld [vmem:[%s428 + $0x438] sm:$0xff]
      %v565 = vld [vmem:[%s428 + $0x440] sm:$0xff]
      %v566 = vld [vmem:[%s428 + $0x448] sm:$0xff]
      %v567 = vld [vmem:[%s428 + $0x450] sm:$0xff]
      %v568 = vld [vmem:[%s428 + $0x458] sm:$0xff]
      %v569 = vld [vmem:[%s428 + $0x460] sm:$0xff]
      %v570 = vld [vmem:[%s428 + $0x468] sm:$0xff]
      %v571 = vld [vmem:[%s428 + $0x470] sm:$0xff]
      %v572 = vld [vmem:[%s428 + $0x478] sm:$0xff]
      %v573 = vld [vmem:[%s428 + $0x480] sm:$0xff]
      %v574 = vld [vmem:[%s428 + $0x488] sm:$0xff]
      %v575 = vld [vmem:[%s428 + $0x490] sm:$0xff]
      %v576 = vld [vmem:[%s428 + $0x498] sm:$0xff]
      %v577 = vld [vmem:[%s428 + $0x4a0] sm:$0xff]
      %v578 = vld [vmem:[%s428 + $0x4a8] sm:$0xff]
      %v579 = vld [vmem:[%s428 + $0x4b0] sm:$0xff]
      %v580 = vld [vmem:[%s428 + $0x4b8] sm:$0xff]
      %v581 = vld [vmem:[%s428 + $0x4c0] sm:$0xff]
      %v582 = vld [vmem:[%s428 + $0x4c8] sm:$0xff]
      %v583 = vld [vmem:[%s428 + $0x4d0] sm:$0xff]
      %v584 = vld [vmem:[%s428 + $0x4d8] sm:$0xff]
      %v585 = vld [vmem:[%s428 + $0x4e0] sm:$0xff]
      %v586 = vld [vmem:[%s428 + $0x4e8] sm:$0xff]
      %v587 = vld [vmem:[%s428 + $0x4f0] sm:$0xff]
      %v588 = vld [vmem:[%s428 + $0x4f8] sm:$0xff]
      %v589 = vld [vmem:[%s428 + $0x500] sm:$0xff]
      %v590 = vld [vmem:[%s428 + $0x508] sm:$0xff]
      %v591 = vld [vmem:[%s428 + $0x510] sm:$0xff]
      %v592 = vld [vmem:[%s428 + $0x518] sm:$0xff]
      %v593 = vld [vmem:[%s428 + $0x520] sm:$0xff]
      %v594 = vld [vmem:[%s428 + $0x528] sm:$0xff]
      %v595 = vld [vmem:[%s428 + $0x530] sm:$0xff]
      %v596 = vld [vmem:[%s428 + $0x538] sm:$0xff]
      %v597 = vld [vmem:[%s428 + $0x540] sm:$0xff]
      %v598 = vld [vmem:[%s428 + $0x548] sm:$0xff]
      %v599 = vld [vmem:[%s428 + $0x550] sm:$0xff]
      %v600 = vld [vmem:[%s428 + $0x558] sm:$0xff]
      %v601 = vld [vmem:[%s428 + $0x560] sm:$0xff]
      %v602 = vld [vmem:[%s428 + $0x568] sm:$0xff]
      %v603 = vld [vmem:[%s428 + $0x570] sm:$0xff]
      %v604 = vld [vmem:[%s428 + $0x578] sm:$0xff]
      %v605 = vld [vmem:[%s428 + $0x580] sm:$0xff]
      %v606 = vld [vmem:[%s428 + $0x588] sm:$0xff]
      %v607 = vld [vmem:[%s428 + $0x590] sm:$0xff]
      %v608 = vld [vmem:[%s428 + $0x598] sm:$0xff]
      %v609 = vld [vmem:[%s428 + $0x5a0] sm:$0xff]
      %v610 = vld [vmem:[%s428 + $0x5a8] sm:$0xff]
      %v611 = vld [vmem:[%s428 + $0x5b0] sm:$0xff]
      %v612 = vld [vmem:[%s428 + $0x5b8] sm:$0xff]
      %v613 = vld [vmem:[%s428 + $0x5c0] sm:$0xff]
      %v614 = vld [vmem:[%s428 + $0x5c8] sm:$0xff]
      %v615 = vld [vmem:[%s428 + $0x5d0] sm:$0xff]
      %v616 = vld [vmem:[%s428 + $0x5d8] sm:$0xff]
      %v617 = vld [vmem:[%s428 + $0x5e0] sm:$0xff]
      %v618 = vld [vmem:[%s428 + $0x5e8] sm:$0x7f]
      %vm619 = vcmask 908288
      %v621 = vsel %vm619, %v246, 0
      %v624 = vsel %vm619, %v258, 0
      %v627 = vsel %vm619, %v270, 0
      %v630 = vsel %vm619, %v282, 0
      %v633 = vsel %vm619, %v294, 0
      %v636 = vsel %vm619, %v306, 0
      %v639 = vsel %vm619, %v318, 0
      %v642 = vsel %vm619, %v330, 0
      %v645 = vsel %vm619, %v342, 0
      %v648 = vsel %vm619, %v354, 0
      %v651 = vsel %vm619, %v366, 0
      %v654 = vsel %vm619, %v378, 0
      %v657 = vsel %vm619, %v390, 0
      %v660 = vsel %vm619, %v402, 0
      %v663 = vsel %vm619, %v414, 0
      %v666 = vsel %vm619, %v426, 0
      %vm668 = vcmask 1046528
      %v670 = vsel %vm668, %v618, 0
      %672 = vmatprep.subr.mxu0 0.0
      %673 = vmatpush1.msra.mxu0 %v429
      %674 = vmatprep.subr.mxu0 0.0
      %675 = vmatpush1.msra.mxu0 %v430
      %676 = vmatprep.subr.mxu0 0.0
      %677 = vmatpush1.msra.mxu0 %v431
      %678 = vmatprep.subr.mxu0 0.0
      %679 = vmatpush1.msra.mxu0 %v432
      %680 = vmatprep.subr.mxu0 0.0
      %681 = vmatpush1.msra.mxu0 %v433
      %682 = vmatprep.subr.mxu0 0.0
      %683 = vmatpush1.msra.mxu0 %v434
      %684 = vmatprep.subr.mxu0 0.0
      %685 = vmatpush1.msra.mxu0 %v435
      %686 = vmatprep.subr.mxu0 0.0
      %687 = vmatpush1.msra.mxu0 %v436
      %688 = vmatprep.subr.mxu0 0.0
      %689 = vmatpush1.msra.mxu0 %v437
      %690 = vmatprep.subr.mxu0 0.0
      %691 = vmatpush1.msra.mxu0 %v438
      %692 = vmatprep.subr.mxu0 0.0
      %693 = vmatpush1.msra.mxu0 %v439
      %694 = vmatprep.subr.mxu0 0.0
      %695 = vmatpush1.msra.mxu0 %v440
      %696 = vmatprep.subr.mxu0 0.0
      %697 = vmatpush1.msra.mxu0 %v441
      %698 = vmatprep.subr.mxu0 0.0
      %699 = vmatpush1.msra.mxu0 %v442
      %700 = vmatprep.subr.mxu0 0.0
      %701 = vmatpush1.msra.mxu0 %v443
      %702 = vmatprep.subr.mxu0 0.0
      %703 = vmatpush1.msra.mxu0 %v444
      %704 = vmatprep.subr.mxu0 0.0
      %705 = vmatpush1.msra.mxu0 %v445
      %706 = vmatprep.subr.mxu0 0.0
      %707 = vmatpush1.msra.mxu0 %v446
      %708 = vmatprep.subr.mxu0 0.0
      %709 = vmatpush1.msra.mxu0 %v447
      %710 = vmatprep.subr.mxu0 0.0
      %711 = vmatpush1.msra.mxu0 %v448
      %712 = vmatprep.subr.mxu0 0.0
      %713 = vmatpush1.msra.mxu0 %v449
      %714 = vmatprep.subr.mxu0 0.0
      %715 = vmatpush1.msra.mxu0 %v450
      %716 = vmatprep.subr.mxu0 0.0
      %717 = vmatpush1.msra.mxu0 %v451
      %718 = vmatprep.subr.mxu0 0.0
      %719 = vmatpush1.msra.mxu0 %v452
      %720 = vmatprep.subr.mxu0 0.0
      %721 = vmatpush1.msra.mxu0 %v453
      %722 = vmatprep.subr.mxu0 0.0
      %723 = vmatpush1.msra.mxu0 %v454
      %724 = vmatprep.subr.mxu0 0.0
      %725 = vmatpush1.msra.mxu0 %v455
      %726 = vmatprep.subr.mxu0 0.0
      %727 = vmatpush1.msra.mxu0 %v456
      %728 = vmatprep.subr.mxu0 0.0
      %729 = vmatpush1.msra.mxu0 %v457
      %730 = vmatprep.subr.mxu0 0.0
      %731 = vmatpush1.msra.mxu0 %v458
      %732 = vmatprep.subr.mxu0 0.0
      %733 = vmatpush1.msra.mxu0 %v459
      %734 = vmatprep.subr.mxu0 0.0
      %735 = vmatpush1.msra.mxu0 %v460
      %736 = vmatprep.mubr.f32.mxu0 %v236
      %737 = vmatmul.mubr.f32.gmra.mrb[0].mxu0 %v235
      %v738 = vpop.f32.mrb[0].mxu0
      %v739 = vadd.f32 0.0, %v738
      %v740 = vpop.f32.mrb[0].mxu0
      %741 = vmatprep.mubr.f32.mxu0 %v248
      %742 = vmatmul.mubr.f32.gmra.mrb[0].mxu0 %v247
      %v743 = vpop.f32.mrb[0].mxu0
      %v744 = vadd.f32 0.0, %v743
      %v745 = vpop.f32.mrb[0].mxu0
      %746 = vmatprep.mubr.f32.mxu0 %v260
      %747 = vmatmul.mubr.f32.gmra.mrb[0].mxu0 %v259
      %v748 = vpop.f32.mrb[0].mxu0
      %v749 = vadd.f32 0.0, %v748
      %v750 = vpop.f32.mrb[0].mxu0
      %751 = vmatprep.mubr.f32.mxu0 %v272
      %752 = vmatmul.mubr.f32.gmra.mrb[0].mxu0 %v271
      %v753 = vpop.f32.mrb[0].mxu0
      %v754 = vadd.f32 0.0, %v753
      %v755 = vpop.f32.mrb[0].mxu0
      %756 = vmatprep.mubr.f32.mxu0 %v284
      %757 = vmatmul.mubr.f32.gmra.mrb[0].mxu0 %v283
      %v758 = vpop.f32.mrb[0].mxu0
      %v759 = vadd.f32 0.0, %v758
      %v760 = vpop.f32.mrb[0].mxu0
      %761 = vmatprep.mubr.f32.mxu0 %v296
      %762 = vmatmul.mubr.f32.gmra.mrb[0].mxu0 %v295
      %v763 = vpop.f32.mrb[0].mxu0
      %v764 = vadd.f32 0.0, %v763
      %v765 = vpop.f32.mrb[0].mxu0
      %766 = vmatprep.mubr.f32.mxu0 %v308
      %767 = vmatmul.mubr.f32.gmra.mrb[0].mxu0 %v307
      %v768 = vpop.f32.mrb[0].mxu0
      %v769 = vadd.f32 0.0, %v768
      %v770 = vpop.f32.mrb[0].mxu0
      %771 = vmatprep.mubr.f32.mxu0 %v320
      %772 = vmatmul.mubr.f32.gmra.mrb[0].mxu0 %v319
      %v773 = vpop.f32.mrb[0].mxu0
      %v774 = vadd.f32 0.0, %v773
      %v775 = vpop.f32.mrb[0].mxu0
      %776 = vmatprep.mubr.f32.mxu0 %v332
      %777 = vmatmul.mubr.f32.gmra.mrb[0].mxu0 %v331
      %v778 = vpop.f32.mrb[0].mxu0
      %v779 = vadd.f32 0.0, %v778
      %v780 = vpop.f32.mrb[0].mxu0
      %781 = vmatprep.mubr.f32.mxu0 %v344
      %782 = vmatmul.mubr.f32.gmra.mrb[0].mxu0 %v343
      %v783 = vpop.f32.mrb[0].mxu0
      %v784 = vadd.f32 0.0, %v783
      %v785 = vpop.f32.mrb[0].mxu0
      %786 = vmatprep.mubr.f32.mxu0 %v356
      %787 = vmatmul.mubr.f32.gmra.mrb[0].mxu0 %v355
      %v788 = vpop.f32.mrb[0].mxu0
      %v789 = vadd.f32 0.0, %v788
      %v790 = vpop.f32.mrb[0].mxu0
      %791 = vmatprep.mubr.f32.mxu0 %v368
      %792 = vmatmul.mubr.f32.gmra.mrb[0].mxu0 %v367
      %v793 = vpop.f32.mrb[0].mxu0
      %v794 = vadd.f32 0.0, %v793
      %v795 = vpop.f32.mrb[0].mxu0
      %796 = vmatprep.mubr.f32.mxu0 %v380
      %797 = vmatmul.mubr.f32.gmra.mrb[0].mxu0 %v379
      %v798 = vpop.f32.mrb[0].mxu0
      %v799 = vadd.f32 0.0, %v798
      %v800 = vpop.f32.mrb[0].mxu0
      %801 = vmatprep.mubr.f32.mxu0 %v392
      %802 = vmatmul.mubr.f32.gmra.mrb[0].mxu0 %v391
      %v803 = vpop.f32.mrb[0].mxu0
      %v804 = vadd.f32 0.0, %v803
      %v805 = vpop.f32.mrb[0].mxu0
      %806 = vmatprep.mubr.f32.mxu0 %v404
      %807 = vmatmul.mubr.f32.gmra.mrb[0].mxu0 %v403
      %v808 = vpop.f32.mrb[0].mxu0
      %v809 = vadd.f32 0.0, %v808
      %v810 = vpop.f32.mrb[0].mxu0
      %811 = vmatprep.mubr.f32.mxu0 %v416
      %812 = vmatmul.mubr.f32.gmra.mrb[0].mxu0 %v415
      %v813 = vpop.f32.mrb[0].mxu0
      %v814 = vadd.f32 0.0, %v813
      %v815 = vpop.f32.mrb[0].mxu0
      %816 = vdwg.mxu0
      %817 = vmatprep.subr.mxu0 0.0
      %818 = vmatpush1.msra.mxu0 %v461
      %819 = vmatprep.subr.mxu0 0.0
      %820 = vmatpush1.msra.mxu0 %v462
      %821 = vmatprep.subr.mxu0 0.0
      %822 = vmatpush1.msra.mxu0 %v463
      %823 = vmatprep.subr.mxu0 0.0
      %824 = vmatpush1.msra.mxu0 %v464
      %825 = vmatprep.subr.mxu0 0.0
      %826 = vmatpush1.msra.mxu0 %v465
      %827 = vmatprep.subr.mxu0 0.0
      %828 = vmatpush1.msra.mxu0 %v466
      %829 = vmatprep.subr.mxu0 0.0
      %830 = vmatpush1.msra.mxu0 %v467
      %831 = vmatprep.subr.mxu0 0.0
      %832 = vmatpush1.msra.mxu0 %v468
      %833 = vmatprep.subr.mxu0 0.0
      %834 = vmatpush1.msra.mxu0 %v469
      %835 = vmatprep.subr.mxu0 0.0
      %836 = vmatpush1.msra.mxu0 %v470
      %837 = vmatprep.subr.mxu0 0.0
      %838 = vmatpush1.msra.mxu0 %v471
      %839 = vmatprep.subr.mxu0 0.0
      %840 = vmatpush1.msra.mxu0 %v472
      %841 = vmatprep.subr.mxu0 0.0
      %842 = vmatpush1.msra.mxu0 %v473
      %843 = vmatprep.subr.mxu0 0.0
      %844 = vmatpush1.msra.mxu0 %v474
      %845 = vmatprep.subr.mxu0 0.0
      %846 = vmatpush1.msra.mxu0 %v475
      %847 = vmatprep.subr.mxu0 0.0
      %848 = vmatpush1.msra.mxu0 %v476
      %849 = vmatprep.subr.mxu0 0.0
      %850 = vmatpush1.msra.mxu0 %v477
      %851 = vmatprep.subr.mxu0 0.0
      %852 = vmatpush1.msra.mxu0 %v478
      %853 = vmatprep.subr.mxu0 0.0
      %854 = vmatpush1.msra.mxu0 %v479
      %855 = vmatprep.subr.mxu0 0.0
      %856 = vmatpush1.msra.mxu0 %v480
      %857 = vmatprep.subr.mxu0 0.0
      %858 = vmatpush1.msra.mxu0 %v481
      %859 = vmatprep.subr.mxu0 0.0
      %860 = vmatpush1.msra.mxu0 %v482
      %861 = vmatprep.subr.mxu0 0.0
      %862 = vmatpush1.msra.mxu0 %v483
      %863 = vmatprep.subr.mxu0 0.0
      %864 = vmatpush1.msra.mxu0 %v484
      %865 = vmatprep.subr.mxu0 0.0
      %866 = vmatpush1.msra.mxu0 %v485
      %867 = vmatprep.subr.mxu0 0.0
      %868 = vmatpush1.msra.mxu0 %v486
      %869 = vmatprep.subr.mxu0 0.0
      %870 = vmatpush1.msra.mxu0 %v487
      %871 = vmatprep.subr.mxu0 0.0
      %872 = vmatpush1.msra.mxu0 %v488
      %873 = vmatprep.subr.mxu0 0.0
      %874 = vmatpush1.msra.mxu0 %v489
      %875 = vmatprep.subr.mxu0 0.0
      %876 = vmatpush1.msra.mxu0 %v490
      %877 = vmatprep.subr.mxu0 0.0
      %878 = vmatpush1.msra.mxu0 %v491
      %879 = vmatprep.subr.mxu0 0.0
      %880 = vmatpush1.msra.mxu0 %v492
      %881 = vmatprep.mubr.f32.mxu0 %v238
      %882 = vmatmul.mubr.f32.gmra.mrb[0].mxu0 %v237
      %v883 = vpop.f32.mrb[0].mxu0
      %v884 = vadd.f32 %v739, %v883
      %v885 = vpop.f32.mrb[0].mxu0
      %886 = vmatprep.mubr.f32.mxu0 %v250
      %887 = vmatmul.mubr.f32.gmra.mrb[0].mxu0 %v249
      %v888 = vpop.f32.mrb[0].mxu0
      %v889 = vadd.f32 %v744, %v888
      %v890 = vpop.f32.mrb[0].mxu0
      %891 = vmatprep.mubr.f32.mxu0 %v262
      %892 = vmatmul.mubr.f32.gmra.mrb[0].mxu0 %v261
      %v893 = vpop.f32.mrb[0].mxu0
      %v894 = vadd.f32 %v749, %v893
      %v895 = vpop.f32.mrb[0].mxu0
      %896 = vmatprep.mubr.f32.mxu0 %v274
      %897 = vmatmul.mubr.f32.gmra.mrb[0].mxu0 %v273
      %v898 = vpop.f32.mrb[0].mxu0
      %v899 = vadd.f32 %v754, %v898
      %v900 = vpop.f32.mrb[0].mxu0
      %901 = vmatprep.mubr.f32.mxu0 %v286
      %902 = vmatmul.mubr.f32.gmra.mrb[0].mxu0 %v285
      %v903 = vpop.f32.mrb[0].mxu0
      %v904 = vadd.f32 %v759, %v903
      %v905 = vpop.f32.mrb[0].mxu0
      %906 = vmatprep.mubr.f32.mxu0 %v298
      %907 = vmatmul.mubr.f32.gmra.mrb[0].mxu0 %v297
      %v908 = vpop.f32.mrb[0].mxu0
      %v909 = vadd.f32 %v764, %v908
      %v910 = vpop.f32.mrb[0].mxu0
      %911 = vmatprep.mubr.f32.mxu0 %v310
      %912 = vmatmul.mubr.f32.gmra.mrb[0].mxu0 %v309
      %v913 = vpop.f32.mrb[0].mxu0
      %v914 = vadd.f32 %v769, %v913
      %v915 = vpop.f32.mrb[0].mxu0
      %916 = vmatprep.mubr.f32.mxu0 %v322
      %917 = vmatmul.mubr.f32.gmra.mrb[0].mxu0 %v321
      %v918 = vpop.f32.mrb[0].mxu0
      %v919 = vadd.f32 %v774, %v918
      %v920 = vpop.f32.mrb[0].mxu0
      %921 = vmatprep.mubr.f32.mxu0 %v334
      %922 = vmatmul.mubr.f32.gmra.mrb[0].mxu0 %v333
      %v923 = vpop.f32.mrb[0].mxu0
      %v924 = vadd.f32 %v779, %v923
      %v925 = vpop.f32.mrb[0].mxu0
      %926 = vmatprep.mubr.f32.mxu0 %v346
      %927 = vmatmul.mubr.f32.gmra.mrb[0].mxu0 %v345
      %v928 = vpop.f32.mrb[0].mxu0
      %v929 = vadd.f32 %v784, %v928
      %v930 = vpop.f32.mrb[0].mxu0
      %931 = vmatprep.mubr.f32.mxu0 %v358
      %932 = vmatmul.mubr.f32.gmra.mrb[0].mxu0 %v357
      %v933 = vpop.f32.mrb[0].mxu0
      %v934 = vadd.f32 %v789, %v933
      %v935 = vpop.f32.mrb[0].mxu0
      %936 = vmatprep.mubr.f32.mxu0 %v370
      %937 = vmatmul.mubr.f32.gmra.mrb[0].mxu0 %v369
      %v938 = vpop.f32.mrb[0].mxu0
      %v939 = vadd.f32 %v794, %v938
      %v940 = vpop.f32.mrb[0].mxu0
      %941 = vmatprep.mubr.f32.mxu0 %v382
      %942 = vmatmul.mubr.f32.gmra.mrb[0].mxu0 %v381
      %v943 = vpop.f32.mrb[0].mxu0
      %v944 = vadd.f32 %v799, %v943
      %v945 = vpop.f32.mrb[0].mxu0
      %946 = vmatprep.mubr.f32.mxu0 %v394
      %947 = vmatmul.mubr.f32.gmra.mrb[0].mxu0 %v393
      %v948 = vpop.f32.mrb[0].mxu0
      %v949 = vadd.f32 %v804, %v948
      %v950 = vpop.f32.mrb[0].mxu0
      %951 = vmatprep.mubr.f32.mxu0 %v406
      %952 = vmatmul.mubr.f32.gmra.mrb[0].mxu0 %v405
      %v953 = vpop.f32.mrb[0].mxu0
      %v954 = vadd.f32 %v809, %v953
      %v955 = vpop.f32.mrb[0].mxu0
      %956 = vmatprep.mubr.f32.mxu0 %v418
      %957 = vmatmul.mubr.f32.gmra.mrb[0].mxu0 %v417
      %v958 = vpop.f32.mrb[0].mxu0
      %v959 = vadd.f32 %v814, %v958
      %v960 = vpop.f32.mrb[0].mxu0
      %961 = vdwg.mxu0
      %962 = vmatprep.subr.mxu0 0.0
      %963 = vmatpush1.msra.mxu0 %v493
      %964 = vmatprep.subr.mxu0 0.0
      %965 = vmatpush1.msra.mxu0 %v494
      %966 = vmatprep.subr.mxu0 0.0
      %967 = vmatpush1.msra.mxu0 %v495
      %968 = vmatprep.subr.mxu0 0.0
      %969 = vmatpush1.msra.mxu0 %v496
      %970 = vmatprep.subr.mxu0 0.0
      %971 = vmatpush1.msra.mxu0 %v497
      %972 = vmatprep.subr.mxu0 0.0
      %973 = vmatpush1.msra.mxu0 %v498
      %974 = vmatprep.subr.mxu0 0.0
      %975 = vmatpush1.msra.mxu0 %v499
      %976 = vmatprep.subr.mxu0 0.0
      %977 = vmatpush1.msra.mxu0 %v500
      %978 = vmatprep.subr.mxu0 0.0
      %979 = vmatpush1.msra.mxu0 %v501
      %980 = vmatprep.subr.mxu0 0.0
      %981 = vmatpush1.msra.mxu0 %v502
      %982 = vmatprep.subr.mxu0 0.0
      %983 = vmatpush1.msra.mxu0 %v503
      %984 = vmatprep.subr.mxu0 0.0
      %985 = vmatpush1.msra.mxu0 %v504
      %986 = vmatprep.subr.mxu0 0.0
      %987 = vmatpush1.msra.mxu0 %v505
      %988 = vmatprep.subr.mxu0 0.0
      %989 = vmatpush1.msra.mxu0 %v506
      %990 = vmatprep.subr.mxu0 0.0
      %991 = vmatpush1.msra.mxu0 %v507
      %992 = vmatprep.subr.mxu0 0.0
      %993 = vmatpush1.msra.mxu0 %v508
      %994 = vmatprep.subr.mxu0 0.0
      %995 = vmatpush1.msra.mxu0 %v509
      %996 = vmatprep.subr.mxu0 0.0
      %997 = vmatpush1.msra.mxu0 %v510
      %998 = vmatprep.subr.mxu0 0.0
      %999 = vmatpush1.msra.mxu0 %v511
      %1000 = vmatprep.subr.mxu0 0.0
      %1001 = vmatpush1.msra.mxu0 %v512
      %1002 = vmatprep.subr.mxu0 0.0
      %1003 = vmatpush1.msra.mxu0 %v513
      %1004 = vmatprep.subr.mxu0 0.0
      %1005 = vmatpush1.msra.mxu0 %v514
      %1006 = vmatprep.subr.mxu0 0.0
      %1007 = vmatpush1.msra.mxu0 %v515
      %1008 = vmatprep.subr.mxu0 0.0
      %1009 = vmatpush1.msra.mxu0 %v516
      %1010 = vmatprep.subr.mxu0 0.0
      %1011 = vmatpush1.msra.mxu0 %v517
      %1012 = vmatprep.subr.mxu0 0.0
      %1013 = vmatpush1.msra.mxu0 %v518
      %1014 = vmatprep.subr.mxu0 0.0
      %1015 = vmatpush1.msra.mxu0 %v519
      %1016 = vmatprep.subr.mxu0 0.0
      %1017 = vmatpush1.msra.mxu0 %v520
      %1018 = vmatprep.subr.mxu0 0.0
      %1019 = vmatpush1.msra.mxu0 %v521
      %1020 = vmatprep.subr.mxu0 0.0
      %1021 = vmatpush1.msra.mxu0 %v522
      %1022 = vmatprep.subr.mxu0 0.0
      %1023 = vmatpush1.msra.mxu0 %v523
      %1024 = vmatprep.subr.mxu0 0.0
      %1025 = vmatpush1.msra.mxu0 %v524
      %1026 = vmatprep.mubr.f32.mxu0 %v240
      %1027 = vmatmul.mubr.f32.gmra.mrb[0].mxu0 %v239
      %v1028 = vpop.f32.mrb[0].mxu0
      %v1029 = vadd.f32 %v884, %v1028
      %v1030 = vpop.f32.mrb[0].mxu0
      %1031 = vmatprep.mubr.f32.mxu0 %v252
      %1032 = vmatmul.mubr.f32.gmra.mrb[0].mxu0 %v251
      %v1033 = vpop.f32.mrb[0].mxu0
      %v1034 = vadd.f32 %v889, %v1033
      %v1035 = vpop.f32.mrb[0].mxu0
      %1036 = vmatprep.mubr.f32.mxu0 %v264
      %1037 = vmatmul.mubr.f32.gmra.mrb[0].mxu0 %v263
      %v1038 = vpop.f32.mrb[0].mxu0
      %v1039 = vadd.f32 %v894, %v1038
      %v1040 = vpop.f32.mrb[0].mxu0
      %1041 = vmatprep.mubr.f32.mxu0 %v276
      %1042 = vmatmul.mubr.f32.gmra.mrb[0].mxu0 %v275
      %v1043 = vpop.f32.mrb[0].mxu0
      %v1044 = vadd.f32 %v899, %v1043
      %v1045 = vpop.f32.mrb[0].mxu0
      %1046 = vmatprep.mubr.f32.mxu0 %v288
      %1047 = vmatmul.mubr.f32.gmra.mrb[0].mxu0 %v287
      %v1048 = vpop.f32.mrb[0].mxu0
      %v1049 = vadd.f32 %v904, %v1048
      %v1050 = vpop.f32.mrb[0].mxu0
      %1051 = vmatprep.mubr.f32.mxu0 %v300
      %1052 = vmatmul.mubr.f32.gmra.mrb[0].mxu0 %v299
      %v1053 = vpop.f32.mrb[0].mxu0
      %v1054 = vadd.f32 %v909, %v1053
      %v1055 = vpop.f32.mrb[0].mxu0
      %1056 = vmatprep.mubr.f32.mxu0 %v312
      %1057 = vmatmul.mubr.f32.gmra.mrb[0].mxu0 %v311
      %v1058 = vpop.f32.mrb[0].mxu0
      %v1059 = vadd.f32 %v914, %v1058
      %v1060 = vpop.f32.mrb[0].mxu0
      %1061 = vmatprep.mubr.f32.mxu0 %v324
      %1062 = vmatmul.mubr.f32.gmra.mrb[0].mxu0 %v323
      %v1063 = vpop.f32.mrb[0].mxu0
      %v1064 = vadd.f32 %v919, %v1063
      %v1065 = vpop.f32.mrb[0].mxu0
      %1066 = vmatprep.mubr.f32.mxu0 %v336
      %1067 = vmatmul.mubr.f32.gmra.mrb[0].mxu0 %v335
      %v1068 = vpop.f32.mrb[0].mxu0
      %v1069 = vadd.f32 %v924, %v1068
      %v1070 = vpop.f32.mrb[0].mxu0
      %1071 = vmatprep.mubr.f32.mxu0 %v348
      %1072 = vmatmul.mubr.f32.gmra.mrb[0].mxu0 %v347
      %v1073 = vpop.f32.mrb[0].mxu0
      %v1074 = vadd.f32 %v929, %v1073
      %v1075 = vpop.f32.mrb[0].mxu0
      %1076 = vmatprep.mubr.f32.mxu0 %v360
      %1077 = vmatmul.mubr.f32.gmra.mrb[0].mxu0 %v359
      %v1078 = vpop.f32.mrb[0].mxu0
      %v1079 = vadd.f32 %v934, %v1078
      %v1080 = vpop.f32.mrb[0].mxu0
      %1081 = vmatprep.mubr.f32.mxu0 %v372
      %1082 = vmatmul.mubr.f32.gmra.mrb[0].mxu0 %v371
      %v1083 = vpop.f32.mrb[0].mxu0
      %v1084 = vadd.f32 %v939, %v1083
      %v1085 = vpop.f32.mrb[0].mxu0
      %1086 = vmatprep.mubr.f32.mxu0 %v384
      %1087 = vmatmul.mubr.f32.gmra.mrb[0].mxu0 %v383
      %v1088 = vpop.f32.mrb[0].mxu0
      %v1089 = vadd.f32 %v944, %v1088
      %v1090 = vpop.f32.mrb[0].mxu0
      %1091 = vmatprep.mubr.f32.mxu0 %v396
      %1092 = vmatmul.mubr.f32.gmra.mrb[0].mxu0 %v395
      %v1093 = vpop.f32.mrb[0].mxu0
      %v1094 = vadd.f32 %v949, %v1093
      %v1095 = vpop.f32.mrb[0].mxu0
      %1096 = vmatprep.mubr.f32.mxu0 %v408
      %1097 = vmatmul.mubr.f32.gmra.mrb[0].mxu0 %v407
      %v1098 = vpop.f32.mrb[0].mxu0
      %v1099 = vadd.f32 %v954, %v1098
      %v1100 = vpop.f32.mrb[0].mxu0
      %1101 = vmatprep.mubr.f32.mxu0 %v420
      %1102 = vmatmul.mubr.f32.gmra.mrb[0].mxu0 %v419
      %v1103 = vpop.f32.mrb[0].mxu0
      %v1104 = vadd.f32 %v959, %v1103
      %v1105 = vpop.f32.mrb[0].mxu0
      %1106 = vdwg.mxu0
      %1107 = vmatprep.subr.mxu0 0.0
      %1108 = vmatpush1.msra.mxu0 %v525
      %1109 = vmatprep.subr.mxu0 0.0
      %1110 = vmatpush1.msra.mxu0 %v526
      %1111 = vmatprep.subr.mxu0 0.0
      %1112 = vmatpush1.msra.mxu0 %v527
      %1113 = vmatprep.subr.mxu0 0.0
      %1114 = vmatpush1.msra.mxu0 %v528
      %1115 = vmatprep.subr.mxu0 0.0
      %1116 = vmatpush1.msra.mxu0 %v529
      %1117 = vmatprep.subr.mxu0 0.0
      %1118 = vmatpush1.msra.mxu0 %v530
      %1119 = vmatprep.subr.mxu0 0.0
      %1120 = vmatpush1.msra.mxu0 %v531
      %1121 = vmatprep.subr.mxu0 0.0
      %1122 = vmatpush1.msra.mxu0 %v532
      %1123 = vmatprep.subr.mxu0 0.0
      %1124 = vmatpush1.msra.mxu0 %v533
      %1125 = vmatprep.subr.mxu0 0.0
      %1126 = vmatpush1.msra.mxu0 %v534
      %1127 = vmatprep.subr.mxu0 0.0
      %1128 = vmatpush1.msra.mxu0 %v535
      %1129 = vmatprep.subr.mxu0 0.0
      %1130 = vmatpush1.msra.mxu0 %v536
      %1131 = vmatprep.subr.mxu0 0.0
      %1132 = vmatpush1.msra.mxu0 %v537
      %1133 = vmatprep.subr.mxu0 0.0
      %1134 = vmatpush1.msra.mxu0 %v538
      %1135 = vmatprep.subr.mxu0 0.0
      %1136 = vmatpush1.msra.mxu0 %v539
      %1137 = vmatprep.subr.mxu0 0.0
      %1138 = vmatpush1.msra.mxu0 %v540
      %1139 = vmatprep.subr.mxu0 0.0
      %1140 = vmatpush1.msra.mxu0 %v541
      %1141 = vmatprep.subr.mxu0 0.0
      %1142 = vmatpush1.msra.mxu0 %v542
      %1143 = vmatprep.subr.mxu0 0.0
      %1144 = vmatpush1.msra.mxu0 %v543
      %1145 = vmatprep.subr.mxu0 0.0
      %1146 = vmatpush1.msra.mxu0 %v544
      %1147 = vmatprep.subr.mxu0 0.0
      %1148 = vmatpush1.msra.mxu0 %v545
      %1149 = vmatprep.subr.mxu0 0.0
      %1150 = vmatpush1.msra.mxu0 %v546
      %1151 = vmatprep.subr.mxu0 0.0
      %1152 = vmatpush1.msra.mxu0 %v547
      %1153 = vmatprep.subr.mxu0 0.0
      %1154 = vmatpush1.msra.mxu0 %v548
      %1155 = vmatprep.subr.mxu0 0.0
      %1156 = vmatpush1.msra.mxu0 %v549
      %1157 = vmatprep.subr.mxu0 0.0
      %1158 = vmatpush1.msra.mxu0 %v550
      %1159 = vmatprep.subr.mxu0 0.0
      %1160 = vmatpush1.msra.mxu0 %v551
      %1161 = vmatprep.subr.mxu0 0.0
      %1162 = vmatpush1.msra.mxu0 %v552
      %1163 = vmatprep.subr.mxu0 0.0
      %1164 = vmatpush1.msra.mxu0 %v553
      %1165 = vmatprep.subr.mxu0 0.0
      %1166 = vmatpush1.msra.mxu0 %v554
      %1167 = vmatprep.subr.mxu0 0.0
      %1168 = vmatpush1.msra.mxu0 %v555
      %1169 = vmatprep.subr.mxu0 0.0
      %1170 = vmatpush1.msra.mxu0 %v556
      %1171 = vmatprep.mubr.f32.mxu0 %v242
      %1172 = vmatmul.mubr.f32.gmra.mrb[0].mxu0 %v241
      %v1173 = vpop.f32.mrb[0].mxu0
      %v1174 = vadd.f32 %v1029, %v1173
      %v1175 = vpop.f32.mrb[0].mxu0
      %1176 = vmatprep.mubr.f32.mxu0 %v254
      %1177 = vmatmul.mubr.f32.gmra.mrb[0].mxu0 %v253
      %v1178 = vpop.f32.mrb[0].mxu0
      %v1179 = vadd.f32 %v1034, %v1178
      %v1180 = vpop.f32.mrb[0].mxu0
      %1181 = vmatprep.mubr.f32.mxu0 %v266
      %1182 = vmatmul.mubr.f32.gmra.mrb[0].mxu0 %v265
      %v1183 = vpop.f32.mrb[0].mxu0
      %v1184 = vadd.f32 %v1039, %v1183
      %v1185 = vpop.f32.mrb[0].mxu0
      %1186 = vmatprep.mubr.f32.mxu0 %v278
      %1187 = vmatmul.mubr.f32.gmra.mrb[0].mxu0 %v277
      %v1188 = vpop.f32.mrb[0].mxu0
      %v1189 = vadd.f32 %v1044, %v1188
      %v1190 = vpop.f32.mrb[0].mxu0
      %1191 = vmatprep.mubr.f32.mxu0 %v290
      %1192 = vmatmul.mubr.f32.gmra.mrb[0].mxu0 %v289
      %v1193 = vpop.f32.mrb[0].mxu0
      %v1194 = vadd.f32 %v1049, %v1193
      %v1195 = vpop.f32.mrb[0].mxu0
      %1196 = vmatprep.mubr.f32.mxu0 %v302
      %1197 = vmatmul.mubr.f32.gmra.mrb[0].mxu0 %v301
      %v1198 = vpop.f32.mrb[0].mxu0
      %v1199 = vadd.f32 %v1054, %v1198
      %v1200 = vpop.f32.mrb[0].mxu0
      %1201 = vmatprep.mubr.f32.mxu0 %v314
      %1202 = vmatmul.mubr.f32.gmra.mrb[0].mxu0 %v313
      %v1203 = vpop.f32.mrb[0].mxu0
      %v1204 = vadd.f32 %v1059, %v1203
      %v1205 = vpop.f32.mrb[0].mxu0
      %1206 = vmatprep.mubr.f32.mxu0 %v326
      %1207 = vmatmul.mubr.f32.gmra.mrb[0].mxu0 %v325
      %v1208 = vpop.f32.mrb[0].mxu0
      %v1209 = vadd.f32 %v1064, %v1208
      %v1210 = vpop.f32.mrb[0].mxu0
      %1211 = vmatprep.mubr.f32.mxu0 %v338
      %1212 = vmatmul.mubr.f32.gmra.mrb[0].mxu0 %v337
      %v1213 = vpop.f32.mrb[0].mxu0
      %v1214 = vadd.f32 %v1069, %v1213
      %v1215 = vpop.f32.mrb[0].mxu0
      %1216 = vmatprep.mubr.f32.mxu0 %v350
      %1217 = vmatmul.mubr.f32.gmra.mrb[0].mxu0 %v349
      %v1218 = vpop.f32.mrb[0].mxu0
      %v1219 = vadd.f32 %v1074, %v1218
      %v1220 = vpop.f32.mrb[0].mxu0
      %1221 = vmatprep.mubr.f32.mxu0 %v362
      %1222 = vmatmul.mubr.f32.gmra.mrb[0].mxu0 %v361
      %v1223 = vpop.f32.mrb[0].mxu0
      %v1224 = vadd.f32 %v1079, %v1223
      %v1225 = vpop.f32.mrb[0].mxu0
      %1226 = vmatprep.mubr.f32.mxu0 %v374
      %1227 = vmatmul.mubr.f32.gmra.mrb[0].mxu0 %v373
      %v1228 = vpop.f32.mrb[0].mxu0
      %v1229 = vadd.f32 %v1084, %v1228
      %v1230 = vpop.f32.mrb[0].mxu0
      %1231 = vmatprep.mubr.f32.mxu0 %v386
      %1232 = vmatmul.mubr.f32.gmra.mrb[0].mxu0 %v385
      %v1233 = vpop.f32.mrb[0].mxu0
      %v1234 = vadd.f32 %v1089, %v1233
      %v1235 = vpop.f32.mrb[0].mxu0
      %1236 = vmatprep.mubr.f32.mxu0 %v398
      %1237 = vmatmul.mubr.f32.gmra.mrb[0].mxu0 %v397
      %v1238 = vpop.f32.mrb[0].mxu0
      %v1239 = vadd.f32 %v1094, %v1238
      %v1240 = vpop.f32.mrb[0].mxu0
      %1241 = vmatprep.mubr.f32.mxu0 %v410
      %1242 = vmatmul.mubr.f32.gmra.mrb[0].mxu0 %v409
      %v1243 = vpop.f32.mrb[0].mxu0
      %v1244 = vadd.f32 %v1099, %v1243
      %v1245 = vpop.f32.mrb[0].mxu0
      %1246 = vmatprep.mubr.f32.mxu0 %v422
      %1247 = vmatmul.mubr.f32.gmra.mrb[0].mxu0 %v421
      %v1248 = vpop.f32.mrb[0].mxu0
      %v1249 = vadd.f32 %v1104, %v1248
      %v1250 = vpop.f32.mrb[0].mxu0
      %1251 = vdwg.mxu0
      %1252 = vmatprep.subr.mxu0 0.0
      %1253 = vmatpush1.msra.mxu0 %v557
      %1254 = vmatprep.subr.mxu0 0.0
      %1255 = vmatpush1.msra.mxu0 %v558
      %1256 = vmatprep.subr.mxu0 0.0
      %1257 = vmatpush1.msra.mxu0 %v559
      %1258 = vmatprep.subr.mxu0 0.0
      %1259 = vmatpush1.msra.mxu0 %v560
      %1260 = vmatprep.subr.mxu0 0.0
      %1261 = vmatpush1.msra.mxu0 %v561
      %1262 = vmatprep.subr.mxu0 0.0
      %1263 = vmatpush1.msra.mxu0 %v562
      %1264 = vmatprep.subr.mxu0 0.0
      %1265 = vmatpush1.msra.mxu0 %v563
      %1266 = vmatprep.subr.mxu0 0.0
      %1267 = vmatpush1.msra.mxu0 %v564
      %1268 = vmatprep.subr.mxu0 0.0
      %1269 = vmatpush1.msra.mxu0 %v565
      %1270 = vmatprep.subr.mxu0 0.0
      %1271 = vmatpush1.msra.mxu0 %v566
      %1272 = vmatprep.subr.mxu0 0.0
      %1273 = vmatpush1.msra.mxu0 %v567
      %1274 = vmatprep.subr.mxu0 0.0
      %1275 = vmatpush1.msra.mxu0 %v568
      %1276 = vmatprep.subr.mxu0 0.0
      %1277 = vmatpush1.msra.mxu0 %v569
      %1278 = vmatprep.subr.mxu0 0.0
      %1279 = vmatpush1.msra.mxu0 %v570
      %1280 = vmatprep.subr.mxu0 0.0
      %1281 = vmatpush1.msra.mxu0 %v571
      %1282 = vmatprep.subr.mxu0 0.0
      %1283 = vmatpush1.msra.mxu0 %v572
      %1284 = vmatprep.subr.mxu0 0.0
      %1285 = vmatpush1.msra.mxu0 %v573
      %1286 = vmatprep.subr.mxu0 0.0
      %1287 = vmatpush1.msra.mxu0 %v574
      %1288 = vmatprep.subr.mxu0 0.0
      %1289 = vmatpush1.msra.mxu0 %v575
      %1290 = vmatprep.subr.mxu0 0.0
      %1291 = vmatpush1.msra.mxu0 %v576
      %1292 = vmatprep.subr.mxu0 0.0
      %1293 = vmatpush1.msra.mxu0 %v577
      %1294 = vmatprep.subr.mxu0 0.0
      %1295 = vmatpush1.msra.mxu0 %v578
      %1296 = vmatprep.subr.mxu0 0.0
      %1297 = vmatpush1.msra.mxu0 %v579
      %1298 = vmatprep.subr.mxu0 0.0
      %1299 = vmatpush1.msra.mxu0 %v580
      %1300 = vmatprep.subr.mxu0 0.0
      %1301 = vmatpush1.msra.mxu0 %v581
      %1302 = vmatprep.subr.mxu0 0.0
      %1303 = vmatpush1.msra.mxu0 %v582
      %1304 = vmatprep.subr.mxu0 0.0
      %1305 = vmatpush1.msra.mxu0 %v583
      %1306 = vmatprep.subr.mxu0 0.0
      %1307 = vmatpush1.msra.mxu0 %v584
      %1308 = vmatprep.subr.mxu0 0.0
      %1309 = vmatpush1.msra.mxu0 %v585
      %1310 = vmatprep.subr.mxu0 0.0
      %1311 = vmatpush1.msra.mxu0 %v586
      %1312 = vmatprep.subr.mxu0 0.0
      %1313 = vmatpush1.msra.mxu0 %v587
      %1314 = vmatprep.subr.mxu0 0.0
      %1315 = vmatpush1.msra.mxu0 %v588
      %1316 = vmatprep.mubr.f32.mxu0 %v244
      %1317 = vmatmul.mubr.f32.gmra.mrb[0].mxu0 %v243
      %v1318 = vpop.f32.mrb[0].mxu0
      %v1319 = vadd.f32 %v1174, %v1318
      %v1320 = vpop.f32.mrb[0].mxu0
      %1321 = vmatprep.mubr.f32.mxu0 %v256
      %1322 = vmatmul.mubr.f32.gmra.mrb[0].mxu0 %v255
      %v1323 = vpop.f32.mrb[0].mxu0
      %v1324 = vadd.f32 %v1179, %v1323
      %v1325 = vpop.f32.mrb[0].mxu0
      %1326 = vmatprep.mubr.f32.mxu0 %v268
      %1327 = vmatmul.mubr.f32.gmra.mrb[0].mxu0 %v267
      %v1328 = vpop.f32.mrb[0].mxu0
      %v1329 = vadd.f32 %v1184, %v1328
      %v1330 = vpop.f32.mrb[0].mxu0
      %1331 = vmatprep.mubr.f32.mxu0 %v280
      %1332 = vmatmul.mubr.f32.gmra.mrb[0].mxu0 %v279
      %v1333 = vpop.f32.mrb[0].mxu0
      %v1334 = vadd.f32 %v1189, %v1333
      %v1335 = vpop.f32.mrb[0].mxu0
      %1336 = vmatprep.mubr.f32.mxu0 %v292
      %1337 = vmatmul.mubr.f32.gmra.mrb[0].mxu0 %v291
      %v1338 = vpop.f32.mrb[0].mxu0
      %v1339 = vadd.f32 %v1194, %v1338
      %v1340 = vpop.f32.mrb[0].mxu0
      %1341 = vmatprep.mubr.f32.mxu0 %v304
      %1342 = vmatmul.mubr.f32.gmra.mrb[0].mxu0 %v303
      %v1343 = vpop.f32.mrb[0].mxu0
      %v1344 = vadd.f32 %v1199, %v1343
      %v1345 = vpop.f32.mrb[0].mxu0
      %1346 = vmatprep.mubr.f32.mxu0 %v316
      %1347 = vmatmul.mubr.f32.gmra.mrb[0].mxu0 %v315
      %v1348 = vpop.f32.mrb[0].mxu0
      %v1349 = vadd.f32 %v1204, %v1348
      %v1350 = vpop.f32.mrb[0].mxu0
      %1351 = vmatprep.mubr.f32.mxu0 %v328
      %1352 = vmatmul.mubr.f32.gmra.mrb[0].mxu0 %v327
      %v1353 = vpop.f32.mrb[0].mxu0
      %v1354 = vadd.f32 %v1209, %v1353
      %v1355 = vpop.f32.mrb[0].mxu0
      %1356 = vmatprep.mubr.f32.mxu0 %v340
      %1357 = vmatmul.mubr.f32.gmra.mrb[0].mxu0 %v339
      %v1358 = vpop.f32.mrb[0].mxu0
      %v1359 = vadd.f32 %v1214, %v1358
      %v1360 = vpop.f32.mrb[0].mxu0
      %1361 = vmatprep.mubr.f32.mxu0 %v352
      %1362 = vmatmul.mubr.f32.gmra.mrb[0].mxu0 %v351
      %v1363 = vpop.f32.mrb[0].mxu0
      %v1364 = vadd.f32 %v1219, %v1363
      %v1365 = vpop.f32.mrb[0].mxu0
      %1366 = vmatprep.mubr.f32.mxu0 %v364
      %1367 = vmatmul.mubr.f32.gmra.mrb[0].mxu0 %v363
      %v1368 = vpop.f32.mrb[0].mxu0
      %v1369 = vadd.f32 %v1224, %v1368
      %v1370 = vpop.f32.mrb[0].mxu0
      %1371 = vmatprep.mubr.f32.mxu0 %v376
      %1372 = vmatmul.mubr.f32.gmra.mrb[0].mxu0 %v375
      %v1373 = vpop.f32.mrb[0].mxu0
      %v1374 = vadd.f32 %v1229, %v1373
      %v1375 = vpop.f32.mrb[0].mxu0
      %1376 = vmatprep.mubr.f32.mxu0 %v388
      %1377 = vmatmul.mubr.f32.gmra.mrb[0].mxu0 %v387
      %v1378 = vpop.f32.mrb[0].mxu0
      %v1379 = vadd.f32 %v1234, %v1378
      %v1380 = vpop.f32.mrb[0].mxu0
      %1381 = vmatprep.mubr.f32.mxu0 %v400
      %1382 = vmatmul.mubr.f32.gmra.mrb[0].mxu0 %v399
      %v1383 = vpop.f32.mrb[0].mxu0
      %v1384 = vadd.f32 %v1239, %v1383
      %v1385 = vpop.f32.mrb[0].mxu0
      %1386 = vmatprep.mubr.f32.mxu0 %v412
      %1387 = vmatmul.mubr.f32.gmra.mrb[0].mxu0 %v411
      %v1388 = vpop.f32.mrb[0].mxu0
      %v1389 = vadd.f32 %v1244, %v1388
      %v1390 = vpop.f32.mrb[0].mxu0
      %1391 = vmatprep.mubr.f32.mxu0 %v424
      %1392 = vmatmul.mubr.f32.gmra.mrb[0].mxu0 %v423
      %v1393 = vpop.f32.mrb[0].mxu0
      %v1394 = vadd.f32 %v1249, %v1393
      %v1395 = vpop.f32.mrb[0].mxu0
      %1396 = vdwg.mxu0
      %1397 = vmatprep.subr.mxu0 0.0
      %1398 = vmatpush1.msra.mxu0 %v589
      %1399 = vmatprep.subr.mxu0 0.0
      %1400 = vmatpush1.msra.mxu0 %v590
      %1401 = vmatprep.subr.mxu0 0.0
      %1402 = vmatpush1.msra.mxu0 %v591
      %1403 = vmatprep.subr.mxu0 0.0
      %1404 = vmatpush1.msra.mxu0 %v592
      %1405 = vmatprep.subr.mxu0 0.0
      %1406 = vmatpush1.msra.mxu0 %v593
      %1407 = vmatprep.subr.mxu0 0.0
      %1408 = vmatpush1.msra.mxu0 %v594
      %1409 = vmatprep.subr.mxu0 0.0
      %1410 = vmatpush1.msra.mxu0 %v595
      %1411 = vmatprep.subr.mxu0 0.0
      %1412 = vmatpush1.msra.mxu0 %v596
      %1413 = vmatprep.subr.mxu0 0.0
      %1414 = vmatpush1.msra.mxu0 %v597
      %1415 = vmatprep.subr.mxu0 0.0
      %1416 = vmatpush1.msra.mxu0 %v598
      %1417 = vmatprep.subr.mxu0 0.0
      %1418 = vmatpush1.msra.mxu0 %v599
      %1419 = vmatprep.subr.mxu0 0.0
      %1420 = vmatpush1.msra.mxu0 %v600
      %1421 = vmatprep.subr.mxu0 0.0
      %1422 = vmatpush1.msra.mxu0 %v601
      %1423 = vmatprep.subr.mxu0 0.0
      %1424 = vmatpush1.msra.mxu0 %v602
      %1425 = vmatprep.subr.mxu0 0.0
      %1426 = vmatpush1.msra.mxu0 %v603
      %1427 = vmatprep.subr.mxu0 0.0
      %1428 = vmatpush1.msra.mxu0 %v604
      %1429 = vmatprep.subr.mxu0 0.0
      %1430 = vmatpush1.msra.mxu0 %v605
      %1431 = vmatprep.subr.mxu0 0.0
      %1432 = vmatpush1.msra.mxu0 %v606
      %1433 = vmatprep.subr.mxu0 0.0
      %1434 = vmatpush1.msra.mxu0 %v607
      %1435 = vmatprep.subr.mxu0 0.0
      %1436 = vmatpush1.msra.mxu0 %v608
      %1437 = vmatprep.subr.mxu0 0.0
      %1438 = vmatpush1.msra.mxu0 %v609
      %1439 = vmatprep.subr.mxu0 0.0
      %1440 = vmatpush1.msra.mxu0 %v610
      %1441 = vmatprep.subr.mxu0 0.0
      %1442 = vmatpush1.msra.mxu0 %v611
      %1443 = vmatprep.subr.mxu0 0.0
      %1444 = vmatpush1.msra.mxu0 %v612
      %1445 = vmatprep.subr.mxu0 0.0
      %1446 = vmatpush1.msra.mxu0 %v613
      %1447 = vmatprep.subr.mxu0 0.0
      %1448 = vmatpush1.msra.mxu0 %v614
      %1449 = vmatprep.subr.mxu0 0.0
      %1450 = vmatpush1.msra.mxu0 %v615
      %1451 = vmatprep.subr.mxu0 0.0
      %1452 = vmatpush1.msra.mxu0 %v616
      %1453 = vmatprep.subr.mxu0 0.0
      %1454 = vmatpush1.msra.mxu0 %v617
      %1455 = vmatprep.subr.mxu0 0.0
      %1456 = vmatpush1.msra.mxu0 %v670
      %1457 = vmatprep.subr.mxu0 0.0
      %1458 = vmatpush1.msra.mxu0 0.0
      %1459 = vmatprep.subr.mxu0 0.0
      %1460 = vmatpush1.msra.mxu0 0.0
      %1461 = vmatprep.mubr.f32.mxu0 %v621
      %1462 = vmatmul.mubr.f32.gmra.mrb[0].mxu0 %v245
      %v1463 = vpop.f32.mrb[0].mxu0
      %v1464 = vadd.f32 %v1319, %v1463
      %v1465 = vpop.f32.mrb[0].mxu0
      %1466 = vmatprep.mubr.f32.mxu0 %v624
      %1467 = vmatmul.mubr.f32.gmra.mrb[0].mxu0 %v257
      %v1468 = vpop.f32.mrb[0].mxu0
      %v1469 = vadd.f32 %v1324, %v1468
      %v1470 = vpop.f32.mrb[0].mxu0
      %1471 = vmatprep.mubr.f32.mxu0 %v627
      %1472 = vmatmul.mubr.f32.gmra.mrb[0].mxu0 %v269
      %v1473 = vpop.f32.mrb[0].mxu0
      %v1474 = vadd.f32 %v1329, %v1473
      %v1475 = vpop.f32.mrb[0].mxu0
      %1476 = vmatprep.mubr.f32.mxu0 %v630
      %1477 = vmatmul.mubr.f32.gmra.mrb[0].mxu0 %v281
      %v1478 = vpop.f32.mrb[0].mxu0
      %v1479 = vadd.f32 %v1334, %v1478
      %v1480 = vpop.f32.mrb[0].mxu0
      %1481 = vmatprep.mubr.f32.mxu0 %v633
      %1482 = vmatmul.mubr.f32.gmra.mrb[0].mxu0 %v293
      %v1483 = vpop.f32.mrb[0].mxu0
      %v1484 = vadd.f32 %v1339, %v1483
      %v1485 = vpop.f32.mrb[0].mxu0
      %1486 = vmatprep.mubr.f32.mxu0 %v636
      %1487 = vmatmul.mubr.f32.gmra.mrb[0].mxu0 %v305
      %v1488 = vpop.f32.mrb[0].mxu0
      %v1489 = vadd.f32 %v1344, %v1488
      %v1490 = vpop.f32.mrb[0].mxu0
      %1491 = vmatprep.mubr.f32.mxu0 %v639
      %1492 = vmatmul.mubr.f32.gmra.mrb[0].mxu0 %v317
      %v1493 = vpop.f32.mrb[0].mxu0
      %v1494 = vadd.f32 %v1349, %v1493
      %v1495 = vpop.f32.mrb[0].mxu0
      %1496 = vmatprep.mubr.f32.mxu0 %v642
      %1497 = vmatmul.mubr.f32.gmra.mrb[0].mxu0 %v329
      %v1498 = vpop.f32.mrb[0].mxu0
      %v1499 = vadd.f32 %v1354, %v1498
      %v1500 = vpop.f32.mrb[0].mxu0
      %1501 = vmatprep.mubr.f32.mxu0 %v645
      %1502 = vmatmul.mubr.f32.gmra.mrb[0].mxu0 %v341
      %v1503 = vpop.f32.mrb[0].mxu0
      %v1504 = vadd.f32 %v1359, %v1503
      %v1505 = vpop.f32.mrb[0].mxu0
      %1506 = vmatprep.mubr.f32.mxu0 %v648
      %1507 = vmatmul.mubr.f32.gmra.mrb[0].mxu0 %v353
      %v1508 = vpop.f32.mrb[0].mxu0
      %v1509 = vadd.f32 %v1364, %v1508
      %v1510 = vpop.f32.mrb[0].mxu0
      %1511 = vmatprep.mubr.f32.mxu0 %v651
      %1512 = vmatmul.mubr.f32.gmra.mrb[0].mxu0 %v365
      %v1513 = vpop.f32.mrb[0].mxu0
      %v1514 = vadd.f32 %v1369, %v1513
      %v1515 = vpop.f32.mrb[0].mxu0
      %1516 = vmatprep.mubr.f32.mxu0 %v654
      %1517 = vmatmul.mubr.f32.gmra.mrb[0].mxu0 %v377
      %v1518 = vpop.f32.mrb[0].mxu0
      %v1519 = vadd.f32 %v1374, %v1518
      %v1520 = vpop.f32.mrb[0].mxu0
      %1521 = vmatprep.mubr.f32.mxu0 %v657
      %1522 = vmatmul.mubr.f32.gmra.mrb[0].mxu0 %v389
      %v1523 = vpop.f32.mrb[0].mxu0
      %v1524 = vadd.f32 %v1379, %v1523
      %v1525 = vpop.f32.mrb[0].mxu0
      %1526 = vmatprep.mubr.f32.mxu0 %v660
      %1527 = vmatmul.mubr.f32.gmra.mrb[0].mxu0 %v401
      %v1528 = vpop.f32.mrb[0].mxu0
      %v1529 = vadd.f32 %v1384, %v1528
      %v1530 = vpop.f32.mrb[0].mxu0
      %1531 = vmatprep.mubr.f32.mxu0 %v663
      %1532 = vmatmul.mubr.f32.gmra.mrb[0].mxu0 %v413
      %v1533 = vpop.f32.mrb[0].mxu0
      %v1534 = vadd.f32 %v1389, %v1533
      %v1535 = vpop.f32.mrb[0].mxu0
      %1536 = vmatprep.mubr.f32.mxu0 %v666
      %1537 = vmatmul.mubr.f32.gmra.mrb[0].mxu0 %v425
      %v1538 = vpop.f32.mrb[0].mxu0
      %v1539 = vadd.f32 %v1394, %v1538
      %v1540 = vpop.f32.mrb[0].mxu0
      %1541 = vdwg.mxu0
      %v1542 = vadd.f32 %v219, %v1464
      %v1543 = vadd.f32 %v220, %v1469
      %v1544 = vadd.f32 %v221, %v1474
      %v1545 = vadd.f32 %v222, %v1479
      %v1546 = vadd.f32 %v223, %v1484
      %v1547 = vadd.f32 %v224, %v1489
      %v1548 = vadd.f32 %v225, %v1494
      %v1549 = vadd.f32 %v226, %v1499
      %v1550 = vadd.f32 %v227, %v1504
      %v1551 = vadd.f32 %v228, %v1509
      %v1552 = vadd.f32 %v229, %v1514
      %v1553 = vadd.f32 %v230, %v1519
      %v1554 = vadd.f32 %v231, %v1524
      %v1555 = vadd.f32 %v232, %v1529
      %v1556 = vadd.f32 %v233, %v1534
      %v1557 = vadd.f32 %v234, %v1539
      %1558 = vst [vmem:[#allocation2] sm:$0xff] %v1542
      %1559 = vst [vmem:[#allocation2 + $0x8] sm:$0xff] %v1543
      %1560 = vst [vmem:[#allocation2 + $0x10] sm:$0xff] %v1544
      %1561 = vst [vmem:[#allocation2 + $0x18] sm:$0xff] %v1545
      %1562 = vst [vmem:[#allocation2 + $0x20] sm:$0xff] %v1546
      %1563 = vst [vmem:[#allocation2 + $0x28] sm:$0xff] %v1547
      %1564 = vst [vmem:[#allocation2 + $0x30] sm:$0xff] %v1548
      %1565 = vst [vmem:[#allocation2 + $0x38] sm:$0xff] %v1549
      %1566 = vst [vmem:[#allocation2 + $0x40] sm:$0xff] %v1550
      %1567 = vst [vmem:[#allocation2 + $0x48] sm:$0xff] %v1551
      %1568 = vst [vmem:[#allocation2 + $0x50] sm:$0xff] %v1552
      %1569 = vst [vmem:[#allocation2 + $0x58] sm:$0xff] %v1553
      %1570 = vst [vmem:[#allocation2 + $0x60] sm:$0xff] %v1554
      %1571 = vst [vmem:[#allocation2 + $0x68] sm:$0xff] %v1555
      %1572 = vst [vmem:[#allocation2 + $0x70] sm:$0xff] %v1556
      %1573 = vst [vmem:[#allocation2 + $0x78] sm:$0xff] %v1557
      %p1574 = scmp.eq.s32.totalorder %s20, 6
      // Predicated region
      $region33: #{block_forward.2} parent=27 // pred_check
        %p1575 = pneg %p1574
      $region34: #{block_forward.2} parent=27 // pred_check_branch
        %1577 = sbr.rel (%p1575) target = $region36
      $region35: #{block_forward.2} parent=27 // pred_region
        %v1578 = vld [vmem:[#allocation2] sm:$0xff]
        %v1579 = vld [vmem:[#allocation2 + $0x8] sm:$0xff]
        %v1580 = vld [vmem:[#allocation2 + $0x10] sm:$0xff]
        %v1581 = vld [vmem:[#allocation2 + $0x18] sm:$0xff]
        %v1582 = vld [vmem:[#allocation2 + $0x20] sm:$0xff]
        %v1583 = vld [vmem:[#allocation2 + $0x28] sm:$0xff]
        %v1584 = vld [vmem:[#allocation2 + $0x30] sm:$0xff]
        %v1585 = vld [vmem:[#allocation2 + $0x38] sm:$0xff]
        %v1586 = vld [vmem:[#allocation2 + $0x40] sm:$0xff]
        %v1587 = vld [vmem:[#allocation2 + $0x48] sm:$0xff]
        %v1588 = vld [vmem:[#allocation2 + $0x50] sm:$0xff]
        %v1589 = vld [vmem:[#allocation2 + $0x58] sm:$0xff]
        %v1590 = vld [vmem:[#allocation2 + $0x60] sm:$0xff]
        %v1591 = vld [vmem:[#allocation2 + $0x68] sm:$0xff]
        %v1592 = vld [vmem:[#allocation2 + $0x70] sm:$0xff]
        %v1593 = vld [vmem:[#allocation2 + $0x78] sm:$0xff]
        %1594 = vst [vmem:[%s195] sm:$0xff] %v1578
        %1595 = vst [vmem:[%s195 + $0x8] sm:$0xff] %v1579
        %1596 = vst [vmem:[%s195 + $0x10] sm:$0xff] %v1580
        %1597 = vst [vmem:[%s195 + $0x18] sm:$0xff] %v1581
        %1598 = vst [vmem:[%s195 + $0x20] sm:$0xff] %v1582
        %1599 = vst [vmem:[%s195 + $0x28] sm:$0xff] %v1583
        %1600 = vst [vmem:[%s195 + $0x30] sm:$0xff] %v1584
        %1601 = vst [vmem:[%s195 + $0x38] sm:$0xff] %v1585
        %1602 = vst [vmem:[%s195 + $0x40] sm:$0xff] %v1586
        %1603 = vst [vmem:[%s195 + $0x48] sm:$0xff] %v1587
        %1604 = vst [vmem:[%s195 + $0x50] sm:$0xff] %v1588
        %1605 = vst [vmem:[%s195 + $0x58] sm:$0xff] %v1589
        %1606 = vst [vmem:[%s195 + $0x60] sm:$0xff] %v1590
        %1607 = vst [vmem:[%s195 + $0x68] sm:$0xff] %v1591
        %1608 = vst [vmem:[%s195 + $0x70] sm:$0xff] %v1592
        %1609 = vst [vmem:[%s195 + $0x78] sm:$0xff] %v1593
        %v1610 = vmul.f32 %v1578, %v1578
        %v1611 = vmul.f32 %v1579, %v1579
        %v1612 = vmul.f32 %v1580, %v1580
        %v1613 = vmul.f32 %v1581, %v1581
        %v1614 = vmul.f32 %v1582, %v1582
        %v1615 = vmul.f32 %v1583, %v1583
        %v1616 = vmul.f32 %v1584, %v1584
        %v1617 = vmul.f32 %v1585, %v1585
        %v1618 = vmul.f32 %v1586, %v1586
        %v1619 = vmul.f32 %v1587, %v1587
        %v1620 = vmul.f32 %v1588, %v1588
        %v1621 = vmul.f32 %v1589, %v1589
        %v1622 = vmul.f32 %v1590, %v1590
        %v1623 = vmul.f32 %v1591, %v1591
        %v1624 = vmul.f32 %v1592, %v1592
        %v1625 = vmul.f32 %v1593, %v1593
        %v1626 = vadd.f32 %v1610, %v1611
        %v1627 = vadd.f32 %v1626, %v1612
        %v1628 = vadd.f32 %v1627, %v1613
        %v1629 = vadd.f32 %v1628, %v1614
        %v1630 = vadd.f32 %v1629, %v1615
        %v1631 = vadd.f32 %v1630, %v1616
        %v1632 = vadd.f32 %v1631, %v1617
        %v1633 = vadd.f32 %v1632, %v1618
        %v1634 = vadd.f32 %v1633, %v1619
        %v1635 = vadd.f32 %v1634, %v1620
        %v1636 = vadd.f32 %v1635, %v1621
        %v1637 = vadd.f32 %v1636, %v1622
        %v1638 = vadd.f32 %v1637, %v1623
        %v1639 = vadd.f32 %v1638, %v1624
        %v1640 = vadd.f32 %v1639, %v1625
        %v1641 = vrot.slane %v1640, 4
        %v1642 = vadd.f32 %v1640, %v1641
        %v1643 = vrot.slane %v1642, 2
        %v1644 = vadd.f32 %v1642, %v1643
        %v1645 = vrot.slane %v1644, 1
        %v1646 = vadd.f32 %v1644, %v1645
        %1647 = vst [vmem:[%s198] sm:$0x1] %v1646
      $region36: #{block_forward.2} parent=27 // pred_fallthru
        _
      %p1648 = scmp.lt.s32.totalorder %s19, 7
      %s1649 = scalar_select %p1648, %s19, 7
      %s1650 = smul.addr %s1649, 16
      %s1651 = smul.addr %s1650, 8
      %s1652 = scalar_lea.vmem %s2, %s1651
      %p1653 = scmp.lt.s32.totalorder %s19, 7
      %s1654 = scalar_select %p1653, %s19, 7
      %s1655 = scalar_lea.vmem %s3, %s1654
      // Predicated region
      $region37: #{block_forward.2} parent=27 // pred_check
        %p1656 = pneg %p94
      $region38: #{block_forward.2} parent=27 // pred_check_branch
        %1658 = sbr.rel (%p1656) target = $region40
      $region39: #{block_forward.2} parent=27 // pred_region
        _
      $region40: #{block_forward.2} parent=27 // pred_fallthru
        _
      // Predicated region
      $region41: #{block_forward.2} parent=27 // pred_check
        %p1659 = pneg %p120
      $region42: #{block_forward.2} parent=27 // pred_check_branch
        %1661 = sbr.rel (%p1659) target = $region44
      $region43: #{block_forward.2} parent=27 // pred_region
        _
      $region44: #{block_forward.2} parent=27 // pred_fallthru
        _
    $region28: #{block_forward.2} parent=5 // pred_fallthru
      _
    %p1662 = scmp.le.s32.totalorder 2, %s10
    // Predicated region
    $region45: #{block_forward.2} parent=5 // pred_check
      %p1663 = pneg %p1662
    $region46: #{block_forward.2} parent=5 // pred_check_branch
      %1665 = sbr.rel (%p1663) target = $region48
    $region47: #{block_forward.2} parent=5 // pred_region
      %s1666 = ssub.s32 %s10, 2
      // Predicated region
      $region49: #{block_forward.2} parent=47 // pred_check
        %p1667 = pneg %p100
      $region50: #{block_forward.2} parent=47 // pred_check_branch
        %1669 = sbr.rel (%p1667) target = $region52
      $region51: #{block_forward.2} parent=47 // pred_region
        %p1670 = scmp.lt.s32.totalorder %s21, 7
        %s1671 = scalar_select %p1670, %s21, 7
        %s1672 = smul.addr %s1671, 16
        %s1673 = smul.addr %s1672, 8
        %s1674 = scalar_lea.vmem %s2, %s1673
      $region52: #{block_forward.2} parent=47 // pred_fallthru
        _
      // Predicated region
      $region53: #{block_forward.2} parent=47 // pred_check
        %p1675 = pneg %p126
      $region54: #{block_forward.2} parent=47 // pred_check_branch
        %1677 = sbr.rel (%p1675) target = $region56
      $region55: #{block_forward.2} parent=47 // pred_region
        %p1678 = scmp.lt.s32.totalorder %s21, 7
        %s1679 = scalar_select %p1678, %s21, 7
        %s1680 = scalar_lea.vmem %s3, %s1679
      $region56: #{block_forward.2} parent=47 // pred_fallthru
        _
    $region48: #{block_forward.2} parent=5 // pred_fallthru
      _
  $region6: #{block_forward.2} parent=0 // loop_footer
    %s14 = sadd.s32 1, %s10
  $region7: #{block_forward.2} parent=0 // loop_footer_branch
    %9 = sbr.rel target = $region3
  $region8: #{block_forward.2} parent=0 // loop_exit
    _

// kernel: block_forward.3
$region0: #{block_forward.3}
  #allocation0 [shape = 'u32[]', space=smem, size = 0x4, offset = 0x4, fixed_abs, tag = 'smem constant byte address 0x4 - core index']
  #allocation1 [shape = 'u32[144,128]{1,0:T(1,128)}', space=vmem, size = 0x12000, scoped, tag = 'internal scratch']
  %s0 = inlined_call_operand.vmem [shape: f32[8,128,128], index: 0, kind: input, shape index: {}]
  %s1 = inlined_call_operand.vmem [shape: f32[1,128], index: 1, kind: input, shape index: {}]
  %s2 = inlined_call_operand.vmem [shape: f32[1,128], index: 2, kind: input, shape index: {}]
  %s3 = inlined_call_operand.vmem [shape: f32[1,128], index: 3, kind: input, shape index: {}]
  %s4 = inlined_call_operand.vmem [shape: f32[8,128,128], index: 4, kind: output, shape index: {}]
  %s5 = sld [smem:[#allocation0]]
  $region49: #{block_forward.3} parent=0
    _
  %s7 = ssub.s32 1, %s5
  %s8 = scalar_select 0, %s7, %s5
  loop: start=0, step=1, limit=10
  $region2: #{block_forward.3} parent=0 // loop_pre_header
    _
  $region3: #{block_forward.3} parent=0 // loop_header
    %s10 = sphi 0, %s14
    %p11 = scmp.ge.s32.totalorder %s10, 10
    %s20 = sphi 0, %s22
    %s23 = sphi 0, %s20
    %s24 = sphi 0, %s23
    %s40 = sphi 0, %s24
    %s44 = sphi 0, %s44
    %s46 = sphi 0, %s44
    %s47 = sphi 0, %s46
    %s61 = sphi 0, %s47
    %s65 = sphi 0, %s65
    %s67 = sphi 0, %s65
    %s68 = sphi 0, %s67
    %s82 = sphi 0, %s68
    %s86 = sphi 0, %s86
    %s88 = sphi 0, %s86
    %s89 = sphi 0, %s88
    %s103 = sphi 0, %s89
    %s109 = sphi 0, %s111
    %s112 = sphi 0, %s109
    %s113 = sphi 0, %s112
    %s129 = sphi 0, %s113
  $region4: #{block_forward.3} parent=0 // loop_header_branch
    %13 = sbr.rel (%p11) target = $region8
  $region5: #{block_forward.3} parent=0 // loop_body
    %s15 = ssub.s32 %s10, 1
    %s16 = ssub.s32 %s10, 2
    %s17 = sadd.s32 %s10, 1
    %s18 = ssub.s32 %s10, %s17
    %p19 = scmp.eq.s32.totalorder %s18, 0
    %s21 = sadd.s32 %s20, 1
    %s22 = scalar_select %p19, %s20, %s21
    %p25 = pneg %p19
    %p26 = scmp.eq.s32.totalorder %s10, 7
    %p27 = por %p25, %p26
    %p28 = scmp.ne.s32.totalorder %s20, %s23
    %p29 = scmp.eq.s32.totalorder %s10, 0
    %p30 = por %p28, %p29
    %p31 = scmp.ne.s32.totalorder %s20, %s23
    %p32 = scmp.eq.s32.totalorder %s15, 7
    %p33 = por %p31, %p32
    %p34 = scmp.ne.s32.totalorder %s23, %s24
    %p35 = scmp.eq.s32.totalorder %s15, 0
    %p36 = por %p34, %p35
    %p37 = scmp.ne.s32.totalorder %s23, %s24
    %p38 = scmp.eq.s32.totalorder %s16, 7
    %p39 = por %p37, %p38
    %p41 = scmp.ne.s32.totalorder %s24, %s40
    %p42 = scmp.eq.s32.totalorder %s16, 0
    %p43 = por %p41, %p42
    %s45 = sadd.s32 %s44, 1
    %p48 = scmp.eq.s32.totalorder %s10, 7
    %p49 = scmp.ne.s32.totalorder %s44, %s46
    %p50 = scmp.eq.s32.totalorder %s10, 0
    %p51 = por %p49, %p50
    %p52 = scmp.ne.s32.totalorder %s44, %s46
    %p53 = scmp.eq.s32.totalorder %s15, 7
    %p54 = por %p52, %p53
    %p55 = scmp.ne.s32.totalorder %s46, %s47
    %p56 = scmp.eq.s32.totalorder %s15, 0
    %p57 = por %p55, %p56
    %p58 = scmp.ne.s32.totalorder %s46, %s47
    %p59 = scmp.eq.s32.totalorder %s16, 7
    %p60 = por %p58, %p59
    %p62 = scmp.ne.s32.totalorder %s47, %s61
    %p63 = scmp.eq.s32.totalorder %s16, 0
    %p64 = por %p62, %p63
    %s66 = sadd.s32 %s65, 1
    %p69 = scmp.eq.s32.totalorder %s10, 7
    %p70 = scmp.ne.s32.totalorder %s65, %s67
    %p71 = scmp.eq.s32.totalorder %s10, 0
    %p72 = por %p70, %p71
    %p73 = scmp.ne.s32.totalorder %s65, %s67
    %p74 = scmp.eq.s32.totalorder %s15, 7
    %p75 = por %p73, %p74
    %p76 = scmp.ne.s32.totalorder %s67, %s68
    %p77 = scmp.eq.s32.totalorder %s15, 0
    %p78 = por %p76, %p77
    %p79 = scmp.ne.s32.totalorder %s67, %s68
    %p80 = scmp.eq.s32.totalorder %s16, 7
    %p81 = por %p79, %p80
    %p83 = scmp.ne.s32.totalorder %s68, %s82
    %p84 = scmp.eq.s32.totalorder %s16, 0
    %p85 = por %p83, %p84
    %s87 = sadd.s32 %s86, 1
    %p90 = scmp.eq.s32.totalorder %s10, 7
    %p91 = scmp.ne.s32.totalorder %s86, %s88
    %p92 = scmp.eq.s32.totalorder %s10, 0
    %p93 = por %p91, %p92
    %p94 = scmp.ne.s32.totalorder %s86, %s88
    %p95 = scmp.eq.s32.totalorder %s15, 7
    %p96 = por %p94, %p95
    %p97 = scmp.ne.s32.totalorder %s88, %s89
    %p98 = scmp.eq.s32.totalorder %s15, 0
    %p99 = por %p97, %p98
    %p100 = scmp.ne.s32.totalorder %s88, %s89
    %p101 = scmp.eq.s32.totalorder %s16, 7
    %p102 = por %p100, %p101
    %p104 = scmp.ne.s32.totalorder %s89, %s103
    %p105 = scmp.eq.s32.totalorder %s16, 0
    %p106 = por %p104, %p105
    %s107 = ssub.s32 %s10, %s17
    %p108 = scmp.eq.s32.totalorder %s107, 0
    %s110 = sadd.s32 %s109, 1
    %s111 = scalar_select %p108, %s109, %s110
    %p114 = pneg %p108
    %p115 = scmp.eq.s32.totalorder %s10, 7
    %p116 = por %p114, %p115
    %p117 = scmp.ne.s32.totalorder %s109, %s112
    %p118 = scmp.eq.s32.totalorder %s10, 0
    %p119 = por %p117, %p118
    %p120 = scmp.ne.s32.totalorder %s109, %s112
    %p121 = scmp.eq.s32.totalorder %s15, 7
    %p122 = por %p120, %p121
    %p123 = scmp.ne.s32.totalorder %s112, %s113
    %p124 = scmp.eq.s32.totalorder %s15, 0
    %p125 = por %p123, %p124
    %p126 = scmp.ne.s32.totalorder %s112, %s113
    %p127 = scmp.eq.s32.totalorder %s16, 7
    %p128 = por %p126, %p127
    %p130 = scmp.ne.s32.totalorder %s113, %s129
    %p131 = scmp.eq.s32.totalorder %s16, 0
    %p132 = por %p130, %p131
    %p133 = scmp.le.s32.totalorder 1, %s10
    %p134 = scmp.lt.s32.totalorder %s10, 9
    %p135 = pnand %p133, %p134
    %p136 = pneg %p135
    // Predicated region
    $region9: #{block_forward.3} parent=5 // pred_check
      _
    $region10: #{block_forward.3} parent=5 // pred_check_branch
      %138 = sbr.rel (%p135) target = $region12
    $region11: #{block_forward.3} parent=5 // pred_region
      %s139 = ssub.s32 %s10, 1
      // Predicated region
      $region13: #{block_forward.3} parent=11 // pred_check
        %p140 = pneg %p57
      $region14: #{block_forward.3} parent=11 // pred_check_branch
        %142 = sbr.rel (%p140) target = $region16
      $region15: #{block_forward.3} parent=11 // pred_region
        _
      $region16: #{block_forward.3} parent=11 // pred_fallthru
        _
      // Predicated region
      $region17: #{block_forward.3} parent=11 // pred_check
        %p143 = pneg %p78
      $region18: #{block_forward.3} parent=11 // pred_check_branch
        %145 = sbr.rel (%p143) target = $region20
      $region19: #{block_forward.3} parent=11 // pred_region
        _
      $region20: #{block_forward.3} parent=11 // pred_fallthru
        _
      // Predicated region
      $region21: #{block_forward.3} parent=11 // pred_check
        %p146 = pneg %p99
      $region22: #{block_forward.3} parent=11 // pred_check_branch
        %148 = sbr.rel (%p146) target = $region24
      $region23: #{block_forward.3} parent=11 // pred_region
        _
      $region24: #{block_forward.3} parent=11 // pred_fallthru
        _
    $region12: #{block_forward.3} parent=5 // pred_fallthru
      _
    %p149 = scmp.lt.s32.totalorder %s10, 8
    // Predicated region
    $region25: #{block_forward.3} parent=5 // pred_check
      %p150 = pneg %p149
    $region26: #{block_forward.3} parent=5 // pred_check_branch
      %152 = sbr.rel (%p150) target = $region28
    $region27: #{block_forward.3} parent=5 // pred_region
      // Predicated region
      $region29: #{block_forward.3} parent=27 // pred_check
        %p153 = pneg %p30
      $region30: #{block_forward.3} parent=27 // pred_check_branch
        %155 = sbr.rel (%p153) target = $region32
      $region31: #{block_forward.3} parent=27 // pred_region
        %p156 = scmp.lt.s32.totalorder %s10, 7
        %s157 = scalar_select %p156, %s10, 7
        %s158 = smul.addr %s157, 16
        %s159 = smul.addr %s158, 8
        %s160 = scalar_lea.vmem %s0, %s159
      $region32: #{block_forward.3} parent=27 // pred_fallthru
        _
    $region28: #{block_forward.3} parent=5 // pred_fallthru
      _
    %p161 = scmp.le.s32.totalorder 1, %s10
    %p162 = scmp.lt.s32.totalorder %s10, 9
    %p163 = pnand %p161, %p162
    %p164 = pneg %p163
    // Predicated region
    $region33: #{block_forward.3} parent=5 // pred_check
      _
    $region34: #{block_forward.3} parent=5 // pred_check_branch
      %166 = sbr.rel (%p163) target = $region36
    $region35: #{block_forward.3} parent=5 // pred_region
      %s167 = ssub.s32 %s10, 1
      %p168 = scmp.lt.s32.totalorder %s15, 7
      %s169 = scalar_select %p168, %s15, 7
      %s170 = smul.addr %s169, 16
      %s171 = smul.addr %s170, 8
      %s172 = scalar_lea.vmem %s0, %s171
      %p173 = pneg %p36
      %p174 = pneg %p33
      %p175 = pneg %p57
      %p176 = pneg %p54
      %p177 = pneg %p78
      %p178 = pneg %p75
      %p179 = pneg %p99
      %p180 = pneg %p96
      %p181 = pneg %p125
      %p182 = pneg %p122
      %p183 = scmp.lt.s32.totalorder %s15, 7
      %s184 = scalar_select %p183, %s15, 7
      %s185 = smul.addr %s184, 16
      %s186 = smul.addr %s185, 8
      %s187 = scalar_lea.vmem %s4, %s186
      %p188 = scmp.lt.s32.totalorder %s15, 7
      %s189 = scalar_select %p188, %s15, 7
      %s190 = smul.addr %s189, 16
      %s191 = smul.addr %s190, 8
      %s192 = scalar_lea.vmem %s0, %s191
      %p193 = scmp.lt.s32.totalorder %s15, 7
      %s194 = scalar_select %p193, %s15, 7
      %s195 = smul.addr %s194, 16
      %s196 = smul.addr %s195, 8
      %s197 = scalar_lea.vmem %s4, %s196
      %v198 = vld [vmem:[%s192] sm:$0xff]
      %v199 = vld [vmem:[%s192 + $0x8] sm:$0xff]
      %v200 = vld [vmem:[%s192 + $0x10] sm:$0xff]
      %v201 = vld [vmem:[%s192 + $0x18] sm:$0xff]
      %v202 = vld [vmem:[%s192 + $0x20] sm:$0xff]
      %v203 = vld [vmem:[%s192 + $0x28] sm:$0xff]
      %v204 = vld [vmem:[%s192 + $0x30] sm:$0xff]
      %v205 = vld [vmem:[%s192 + $0x38] sm:$0xff]
      %v206 = vld [vmem:[%s192 + $0x40] sm:$0xff]
      %v207 = vld [vmem:[%s192 + $0x48] sm:$0xff]
      %v208 = vld [vmem:[%s192 + $0x50] sm:$0xff]
      %v209 = vld [vmem:[%s192 + $0x58] sm:$0xff]
      %v210 = vld [vmem:[%s192 + $0x60] sm:$0xff]
      %v211 = vld [vmem:[%s192 + $0x68] sm:$0xff]
      %v212 = vld [vmem:[%s192 + $0x70] sm:$0xff]
      %v213 = vld [vmem:[%s192 + $0x78] sm:$0xff]
      %v214 = vld [vmem:[%s1] sm:$0x1]
      %v216 = vlaneseq
      %v217 = vshrl.u32 %v216, 7
      %v218 = vsub.s32 0, %v217
      %v219 = vrot.slane %v214, %v218
      %v221 = vmul.f32 %v198, %v219
      %v222 = vmul.f32 %v199, %v219
      %v223 = vmul.f32 %v200, %v219
      %v224 = vmul.f32 %v201, %v219
      %v225 = vmul.f32 %v202, %v219
      %v226 = vmul.f32 %v203, %v219
      %v227 = vmul.f32 %v204, %v219
      %v228 = vmul.f32 %v205, %v219
      %v229 = vmul.f32 %v206, %v219
      %v230 = vmul.f32 %v207, %v219
      %v231 = vmul.f32 %v208, %v219
      %v232 = vmul.f32 %v209, %v219
      %v233 = vmul.f32 %v210, %v219
      %v234 = vmul.f32 %v211, %v219
      %v235 = vmul.f32 %v212, %v219
      %v236 = vmul.f32 %v213, %v219
      %v237 = vld [vmem:[%s2] sm:$0x1]
      %v239 = vlaneseq
      %v240 = vshrl.u32 %v239, 7
      %v241 = vsub.s32 0, %v240
      %v242 = vrot.slane %v237, %v241
      %v244 = vadd.f32 %v221, %v242
      %v245 = vadd.f32 %v222, %v242
      %v246 = vadd.f32 %v223, %v242
      %v247 = vadd.f32 %v224, %v242
      %v248 = vadd.f32 %v225, %v242
      %v249 = vadd.f32 %v226, %v242
      %v250 = vadd.f32 %v227, %v242
      %v251 = vadd.f32 %v228, %v242
      %v252 = vadd.f32 %v229, %v242
      %v253 = vadd.f32 %v230, %v242
      %v254 = vadd.f32 %v231, %v242
      %v255 = vadd.f32 %v232, %v242
      %v256 = vadd.f32 %v233, %v242
      %v257 = vadd.f32 %v234, %v242
      %v258 = vadd.f32 %v235, %v242
      %v259 = vadd.f32 %v236, %v242
      %v260 = vld [vmem:[%s3] sm:$0x1]
      %vm261 = vcmp.gt.f32.partialorder %v260, 0.0
      %v262 = vmax.f32 %v244, 0.0
      %v263 = vmax.f32 %v245, 0.0
      %v264 = vmax.f32 %v246, 0.0
      %v265 = vmax.f32 %v247, 0.0
      %v266 = vmax.f32 %v248, 0.0
      %v267 = vmax.f32 %v249, 0.0
      %v268 = vmax.f32 %v250, 0.0
      %v269 = vmax.f32 %v251, 0.0
      %v270 = vmax.f32 %v252, 0.0
      %v271 = vmax.f32 %v253, 0.0
      %v272 = vmax.f32 %v254, 0.0
      %v273 = vmax.f32 %v255, 0.0
      %v274 = vmax.f32 %v256, 0.0
      %v275 = vmax.f32 %v257, 0.0
      %v276 = vmax.f32 %v258, 0.0
      %v277 = vmax.f32 %v259, 0.0
      %v278 = vsel %vm261, 1, 0
      %v279 = vlaneseq
      %v280 = vshrl.u32 %v279, 7
      %v281 = vsub.s32 0, %v280
      %v282 = vrot.slane %v278, %v281
      %vm283 = vcmp.eq.s32.totalorder %v282, 1
      %v284 = vsel %vm283, %v262, %v221
      %v285 = vsel %vm283, %v263, %v222
      %v286 = vsel %vm283, %v264, %v223
      %v287 = vsel %vm283, %v265, %v224
      %v288 = vsel %vm283, %v266, %v225
      %v289 = vsel %vm283, %v267, %v226
      %v290 = vsel %vm283, %v268, %v227
      %v291 = vsel %vm283, %v269, %v228
      %v292 = vsel %vm283, %v270, %v229
      %v293 = vsel %vm283, %v271, %v230
      %v294 = vsel %vm283, %v272, %v231
      %v295 = vsel %vm283, %v273, %v232
      %v296 = vsel %vm283, %v274, %v233
      %v297 = vsel %vm283, %v275, %v234
      %v298 = vsel %vm283, %v276, %v235
      %v299 = vsel %vm283, %v277, %v236
      %300 = vst [vmem:[%s197] sm:$0xff] %v284
      %301 = vst [vmem:[%s197 + $0x8] sm:$0xff] %v285
      %302 = vst [vmem:[%s197 + $0x10] sm:$0xff] %v286
      %303 = vst [vmem:[%s197 + $0x18] sm:$0xff] %v287
      %304 = vst [vmem:[%s197 + $0x20] sm:$0xff] %v288
      %305 = vst [vmem:[%s197 + $0x28] sm:$0xff] %v289
      %306 = vst [vmem:[%s197 + $0x30] sm:$0xff] %v290
      %307 = vst [vmem:[%s197 + $0x38] sm:$0xff] %v291
      %308 = vst [vmem:[%s197 + $0x40] sm:$0xff] %v292
      %309 = vst [vmem:[%s197 + $0x48] sm:$0xff] %v293
      %310 = vst [vmem:[%s197 + $0x50] sm:$0xff] %v294
      %311 = vst [vmem:[%s197 + $0x58] sm:$0xff] %v295
      %312 = vst [vmem:[%s197 + $0x60] sm:$0xff] %v296
      %313 = vst [vmem:[%s197 + $0x68] sm:$0xff] %v297
      %314 = vst [vmem:[%s197 + $0x70] sm:$0xff] %v298
      %315 = vst [vmem:[%s197 + $0x78] sm:$0xff] %v299
      %p316 = scmp.lt.s32.totalorder %s15, 7
      %s317 = scalar_select %p316, %s15, 7
      %s318 = smul.addr %s317, 16
      %s319 = smul.addr %s318, 8
      %s320 = scalar_lea.vmem %s4, %s319
      // Predicated region
      $region37: #{block_forward.3} parent=35 // pred_check
        %p321 = pneg %p122
      $region38: #{block_forward.3} parent=35 // pred_check_branch
        %323 = sbr.rel (%p321) target = $region40
      $region39: #{block_forward.3} parent=35 // pred_region
        _
      $region40: #{block_forward.3} parent=35 // pred_fallthru
        _
    $region36: #{block_forward.3} parent=5 // pred_fallthru
      _
    %p324 = scmp.le.s32.totalorder 2, %s10
    // Predicated region
    $region41: #{block_forward.3} parent=5 // pred_check
      %p325 = pneg %p324
    $region42: #{block_forward.3} parent=5 // pred_check_branch
      %327 = sbr.rel (%p325) target = $region44
    $region43: #{block_forward.3} parent=5 // pred_region
      %s328 = ssub.s32 %s10, 2
      // Predicated region
      $region45: #{block_forward.3} parent=43 // pred_check
        %p329 = pneg %p128
      $region46: #{block_forward.3} parent=43 // pred_check_branch
        %331 = sbr.rel (%p329) target = $region48
      $region47: #{block_forward.3} parent=43 // pred_region
        %p332 = scmp.lt.s32.totalorder %s16, 7
        %s333 = scalar_select %p332, %s16, 7
        %s334 = smul.addr %s333, 16
        %s335 = smul.addr %s334, 8
        %s336 = scalar_lea.vmem %s4, %s335
      $region48: #{block_forward.3} parent=43 // pred_fallthru
        _
    $region44: #{block_forward.3} parent=5 // pred_fallthru
      _
  $region6: #{block_forward.3} parent=0 // loop_footer
    %s14 = sadd.s32 1, %s10
  $region7: #{block_forward.3} parent=0 // loop_footer_branch
    %9 = sbr.rel target = $region3
  $region8: #{block_forward.3} parent=0 // loop_exit
    _

</llo_original>
